<compile_context>
chip_gen: v6e
topology: v6e:2x2x1
jax: 0.10.0
libtpu: 0.0.40
codegen_flags: <defaults>
</compile_context>

<pallas_src>
import functools
import math

import jax
import jax.numpy as jnp
from jax.experimental import pallas as pl
from jax.experimental.pallas import tpu as pltpu

# ---- model hyper-parameters (small, consistent with the module) -------------
MODEL_DIM = 32
KEY_DIM = 8
VALUE_DIM = 8
HIDDEN_DIM = 64
NUM_HEAD = 4
DROP_PROB = 0.1  # dropout is identity at inference  # TODO(synk): train-mode dropout not modeled
LN_EPS = 1e-5

BATCH = 2
SEQ = 8

# ---- packed parameter-slab geometry (single operand; see pack_params) -------
QKV_W = NUM_HEAD * (2 * KEY_DIM + VALUE_DIM)   # 96: fused head-major QKV columns
SLAB_W = QKV_W + HIDDEN_DIM + MODEL_DIM        # 192 slab lane width
R_BIAS = MODEL_DIM + HIDDEN_DIM                # row 96: [b_qkv | b_ffn1 | b_o]
R_VEC = R_BIAS + 1                             # row 97: [b_ffn2 | g1 | be1 | g2 | be2 | pad]
SLAB_R = R_VEC + 1                             # 98 rows total
# rows [0, D):        [ W_qkv (96) | W_ffn1 (64) | W_o flattened (32) ]
# rows [D, D+HID):    [ W_ffn2 (32) | zero pad ]


def _layer_norm(x, gamma, beta):
    mu = jnp.mean(x, axis=-1, keepdims=True)
    var = jnp.mean((x - mu) ** 2, axis=-1, keepdims=True)
    return (x - mu) * jax.lax.rsqrt(var + LN_EPS) * gamma + beta


def encoder_layer_kernel(x_ref, mask_ref, p_ref, o_ref, *,
                         num_head, key_dim, value_dim, hidden_dim):
    """One batch element per grid step: MHA -> add&LN -> FFN -> add&LN."""
    x = x_ref[...].astype(jnp.float32)            # (S, D)
    mask = mask_ref[0].astype(jnp.float32)        # (S, S), 1.0 = attend
    d_model = x.shape[-1]
    qkv_w = num_head * (2 * key_dim + value_dim)  # 96
    hb = 2 * key_dim + value_dim                  # 24: per-head [q|k|v] block
    r_bias = d_model + hidden_dim

    # ---------------- unpack the single parameter slab (static windows) ------
    wrow = p_ref[0:d_model, :]                                        # (D, 192)
    w_qkv = wrow[:, 0:qkv_w]                                          # (D, 96); 1/sqrt(Kd) pre-folded
    w1 = wrow[:, qkv_w:qkv_w + hidden_dim]                            # (D, HID)
    wo_h = wrow[:, qkv_w + hidden_dim:qkv_w + hidden_dim + d_model]   # (H*Vd, D)
    wo_h = wo_h.reshape(num_head, value_dim, d_model)                 # (H, Vd, D)
    w2 = p_ref[d_model:d_model + hidden_dim, 0:d_model]               # (HID, D)
    tail = p_ref[r_bias:r_bias + 2, :]                                # (2, 192)
    b_qkv = tail[0:1, 0:qkv_w]
    bf1 = tail[0:1, qkv_w:qkv_w + hidden_dim]
    bo = tail[0:1, qkv_w + hidden_dim:qkv_w + hidden_dim + d_model]
    bf2 = tail[1:2, 0:d_model]
    g1 = tail[1:2, d_model:2 * d_model]
    be1 = tail[1:2, 2 * d_model:3 * d_model]
    g2 = tail[1:2, 3 * d_model:4 * d_model]
    be2 = tail[1:2, 4 * d_model:5 * d_model]

    # ---------------- fused QKV projection: ONE 2-D MXU matmul ---------------
    qkv = jnp.dot(x, w_qkv, preferred_element_type=jnp.float32) + b_qkv   # (S, 96)

    # ---------------- head-batched attention (batch dim = H) -----------------
    # Head-major column order => each head is ONE contiguous 24-lane slice;
    # stacking along a new leading axis is a major-dim concat (no lane shuffle).
    qkv_h = jnp.stack(
        [qkv[:, h * hb:(h + 1) * hb] for h in range(num_head)], axis=0)   # (H, S, 24)
    q = qkv_h[:, :, 0:key_dim]                                            # (H, S, Kd)
    k = qkv_h[:, :, key_dim:2 * key_dim]                                  # (H, S, Kd)
    v = qkv_h[:, :, 2 * key_dim:hb]                                       # (H, S, Vd)

    mask_bias = (mask - 1.0) * 1e9                # 0 where attend, -1e9 where masked
    # contraction is over the trailing dim of both operands (no K transpose needed)
    s = jnp.einsum("nqd,nkd->nqk", q, k,
                   preferred_element_type=jnp.float32) + mask_bias[None]  # (H, S, S)
    s = s - jnp.max(s, axis=-1, keepdims=True)
    p = jnp.exp(s)
    p = p * (1.0 / jnp.sum(p, axis=-1, keepdims=True))   # exact softmax (rows sum to 1)
    ctx = jnp.einsum("nqk,nkd->nqd", p, v,
                     preferred_element_type=jnp.float32)                  # (H, S, Vd)

    # output projection without a lane-dim concat: per-head partials, then add
    part = jnp.einsum("nsv,nvd->nsd", ctx, wo_h,
                      preferred_element_type=jnp.float32)                 # (H, S, D)
    att = jnp.sum(part, axis=0) + bo                                      # (S, D)

    # ---------------- add & norm 1 (dropout1 = identity) ---------------------
    h1 = _layer_norm(att + x, g1, be1)

    # ---------------- feed-forward (Linear -> ReLU -> Linear) ----------------
    f = jnp.dot(h1, w1, preferred_element_type=jnp.float32) + bf1         # (S, HID)
    f = jnp.maximum(f, 0.0)
    f = jnp.dot(f, w2, preferred_element_type=jnp.float32) + bf2          # (S, D)

    # ---------------- add & norm 2 (dropout2 = identity) ---------------------
    out = _layer_norm(f + h1, g2, be2)
    o_ref[...] = out.astype(o_ref.dtype)


def pack_params(params):
    """Pack the 16 logical tensors into ONE (SLAB_R, SLAB_W) f32 slab.

    * QKV weight/bias columns are re-ordered HEAD-MAJOR ([q_h|k_h|v_h] per head)
      so each head is one contiguous lane block inside the kernel.
    * The 1/sqrt(KEY_DIM) attention scale is folded into the q columns
      (weights AND bias) once, host-side.
    """
    (wq, bq, wk, bk, wv, bv, wo, bo,
     g1, be1, w1, bf1, w2, bf2, g2, be2) = params

    assert NUM_HEAD * VALUE_DIM == MODEL_DIM, (
        "slab layout stores W_o inside the D weight rows; requires H*Vd == D")
    assert 5 * MODEL_DIM <= SLAB_W, "LayerNorm/bias vector row does not fit slab width"

    scale = 1.0 / math.sqrt(KEY_DIM)
    wq_s, bq_s = wq * scale, bq * scale

    wb, bb = [], []
    for h in range(NUM_HEAD):
        wb += [wq_s[:, h * KEY_DIM:(h + 1) * KEY_DIM],
               wk[:, h * KEY_DIM:(h + 1) * KEY_DIM],
               wv[:, h * VALUE_DIM:(h + 1) * VALUE_DIM]]
        bb += [bq_s[:, h * KEY_DIM:(h + 1) * KEY_DIM],
               bk[:, h * KEY_DIM:(h + 1) * KEY_DIM],
               bv[:, h * VALUE_DIM:(h + 1) * VALUE_DIM]]
    w_qkv = jnp.concatenate(wb, axis=1)            # (D, 96) head-major
    b_qkv = jnp.concatenate(bb, axis=1)            # (1, 96)

    row_w = jnp.concatenate([w_qkv, w1, wo], axis=1)                    # (D, 192)
    row_w2 = jnp.pad(w2, ((0, 0), (0, SLAB_W - MODEL_DIM)))             # (HID, 192)
    row_b = jnp.concatenate([b_qkv, bf1, bo], axis=1)                   # (1, 192)
    row_v = jnp.concatenate(
        [bf2, g1, be1, g2, be2,
         jnp.zeros((1, SLAB_W - 5 * MODEL_DIM), jnp.float32)], axis=1)  # (1, 192)
    slab = jnp.concatenate([row_w, row_w2, row_b, row_v], axis=0)       # (98, 192)
    assert slab.shape == (SLAB_R, SLAB_W)
    return slab


def encoder_layer(x, mask, slab):
    B, S, D = x.shape
    x_flat = x.reshape(B * S, D)    # layout-compatible reshape in the wrapper

    kernel = functools.partial(
        encoder_layer_kernel, num_head=NUM_HEAD, key_dim=KEY_DIM,
        value_dim=VALUE_DIM, hidden_dim=HIDDEN_DIM)

    out_flat = pl.pallas_call(
        kernel,
        out_shape=jax.ShapeDtypeStruct((B * S, D), x.dtype),
        grid=(B,),
        in_specs=[
            pl.BlockSpec((S, D), lambda b: (b, 0)),              # this batch's tokens
            pl.BlockSpec((1, S, S), lambda b: (b, 0, 0)),        # this batch's mask
            pl.BlockSpec((SLAB_R, SLAB_W), lambda b: (0, 0)),    # params: same block every step
        ],
        out_specs=pl.BlockSpec((S, D), lambda b: (b, 0)),
        compiler_params=pltpu.CompilerParams(
            dimension_semantics=("parallel",)),  # v7x: shard batch over both TCs
    )(x_flat, mask, slab)
    return out_flat.reshape(B, S, D)


def init_params(key):
    """Deterministic synthetic parameters matching the PyTorch module shapes."""
    ks = jax.random.split(key, 8)
    hkd = NUM_HEAD * KEY_DIM
    hvd = NUM_HEAD * VALUE_DIM

    def lin(k, fan_in, fan_out):
        w = jax.random.normal(k, (fan_in, fan_out), jnp.float32) * (1.0 / math.sqrt(fan_in))
        b = jnp.zeros((1, fan_out), jnp.float32)   # biases kept 2D for TPU layout
        return w, b

    wq, bq = lin(ks[0], MODEL_DIM, hkd)
    wk, bk = lin(ks[1], MODEL_DIM, hkd)
    wv, bv = lin(ks[2], MODEL_DIM, hvd)
    wo, bo = lin(ks[3], hvd, MODEL_DIM)
    g1 = jnp.ones((1, MODEL_DIM), jnp.float32)
    be1 = jnp.zeros((1, MODEL_DIM), jnp.float32)
    w1, bf1 = lin(ks[4], MODEL_DIM, HIDDEN_DIM)
    w2, bf2 = lin(ks[5], HIDDEN_DIM, MODEL_DIM)
    g2 = jnp.ones((1, MODEL_DIM), jnp.float32)
    be2 = jnp.zeros((1, MODEL_DIM), jnp.float32)
    return (wq, bq, wk, bk, wv, bv, wo, bo,
            g1, be1, w1, bf1, w2, bf2, g2, be2)


def reference(x, mask, params):
    """Pure-JAX reference of the same forward pass (sanity check)."""
    (wq, bq, wk, bk, wv, bv, wo, bo,
     g1, be1, w1, bf1, w2, bf2, g2, be2) = params
    B, S, D = x.shape

    def ln(h, g, b):
        mu = h.mean(-1, keepdims=True)
        var = ((h - mu) ** 2).mean(-1, keepdims=True)
        return (h - mu) / jnp.sqrt(var + LN_EPS) * g + b

    q = x @ wq + bq
    k = x @ wk + bk
    v = x @ wv + bv
    q = q.reshape(B, S, NUM_HEAD, KEY_DIM).transpose(0, 2, 1, 3)
    k = k.reshape(B, S, NUM_HEAD, KEY_DIM).transpose(0, 2, 1, 3)
    v = v.reshape(B, S, NUM_HEAD, VALUE_DIM).transpose(0, 2, 1, 3)
    scores = jnp.einsum("bhqd,bhkd->bhqk", q, k) / math.sqrt(KEY_DIM)
    scores = jnp.where(mask[:, None, :, :] > 0, scores, -1e9)
    p = jax.nn.softmax(scores, axis=-1)
    att = jnp.einsum("bhqk,bhkd->bhqd", p, v).transpose(0, 2, 1, 3).reshape(B, S, -1)
    att = att @ wo + bo
    h1 = ln(att + x, g1, be1)
    f = jnp.maximum(h1 @ w1 + bf1, 0.0) @ w2 + bf2
    return ln(f + h1, g2, be2)


if __name__ == "__main__":
    key = jax.random.PRNGKey(0)
    kx, kp = jax.random.split(key, 2)

    x = jax.random.normal(kx, (BATCH, SEQ, MODEL_DIM), jnp.float32)
    # simple padding-style mask: last 2 key positions of batch 1 are masked out
    mask = jnp.ones((BATCH, SEQ, SEQ), jnp.float32)
    mask = mask.at[1, :, -2:].set(0.0)

    params = init_params(kp)
    slab = pack_params(params)

    out = jax.block_until_ready(encoder_layer(x, mask, slab))
    ref = reference(x, mask, params)

    assert out.shape == (BATCH, SEQ, MODEL_DIM)
    # Softmax is now exact in the kernel; remaining slack covers TPU
    # DEFAULT-precision matmul differences between the kernel's MXU calls and
    # the fused XLA reference (accumulation-order / pass differences).
    assert jnp.allclose(out, ref, atol=5e-3, rtol=5e-3), "mismatch vs JAX reference"

    print("KERNEL_OK")
</pallas_src>

<mosaic_0001>
module attributes {stable_mosaic.version = 11 : i64} {
  func.func @encoder_layer_kernel(%arg0: i32, %arg1: memref<8x32xf32, #tpu.memory_space<vmem>>, %arg2: memref<1x8x8xf32, #tpu.memory_space<vmem>>, %arg3: memref<98x192xf32, #tpu.memory_space<vmem>>, %arg4: memref<8x32xf32, #tpu.memory_space<vmem>>) attributes {dimension_semantics = [#tpu.dimension_semantics<parallel>], iteration_bounds = array<i64: 2>, scalar_prefetch = 0 : i64, scratch_operands = 0 : i64, tpu.core_type = #tpu.core_type<tc>, window_params = [{transform_indices = @transform_0, window_bounds = array<i64: 8, 32>}, {transform_indices = @transform_1, window_bounds = array<i64: 1, 8, 8>}, {pipeline_mode = #tpu.pipeline_mode<synchronous>, transform_indices = @transform_2, window_bounds = array<i64: 98, 192>}, {transform_indices = @transform_3, window_bounds = array<i64: 8, 32>}]} {
    %c0 = arith.constant 0 : index
    %c0_0 = arith.constant 0 : index
    %0 = vector.load %arg1[%c0, %c0_0] : memref<8x32xf32, #tpu.memory_space<vmem>>, vector<8x32xf32>
    %c0_1 = arith.constant 0 : index
    %c0_2 = arith.constant 0 : index
    %c0_3 = arith.constant 0 : index
    %1 = vector.load %arg2[%c0_1, %c0_2, %c0_3] : memref<1x8x8xf32, #tpu.memory_space<vmem>>, vector<1x8x8xf32>
    %2 = vector.shape_cast %1 : vector<1x8x8xf32> to vector<8x8xf32>
    %c0_4 = arith.constant 0 : index
    %c0_5 = arith.constant 0 : index
    %3 = vector.load %arg3[%c0_4, %c0_5] : memref<98x192xf32, #tpu.memory_space<vmem>>, vector<32x192xf32>
    %4 = vector.extract_strided_slice %3 {offsets = [0, 0], sizes = [32, 96], strides = [1, 1]} : vector<32x192xf32> to vector<32x96xf32>
    %5 = vector.extract_strided_slice %3 {offsets = [0, 96], sizes = [32, 64], strides = [1, 1]} : vector<32x192xf32> to vector<32x64xf32>
    %6 = vector.extract_strided_slice %3 {offsets = [0, 160], sizes = [32, 32], strides = [1, 1]} : vector<32x192xf32> to vector<32x32xf32>
    %7 = vector.shape_cast %6 : vector<32x32xf32> to vector<4x8x32xf32>
    %c32 = arith.constant 32 : index
    %c0_6 = arith.constant 0 : index
    %8 = vector.load %arg3[%c32, %c0_6] : memref<98x192xf32, #tpu.memory_space<vmem>>, vector<64x32xf32>
    %c96 = arith.constant 96 : index
    %c0_7 = arith.constant 0 : index
    %9 = vector.load %arg3[%c96, %c0_7] : memref<98x192xf32, #tpu.memory_space<vmem>>, vector<2x192xf32>
    %10 = vector.extract_strided_slice %9 {offsets = [0, 0], sizes = [1, 96], strides = [1, 1]} : vector<2x192xf32> to vector<1x96xf32>
    %11 = vector.extract_strided_slice %9 {offsets = [0, 96], sizes = [1, 64], strides = [1, 1]} : vector<2x192xf32> to vector<1x64xf32>
    %12 = vector.extract_strided_slice %9 {offsets = [0, 160], sizes = [1, 32], strides = [1, 1]} : vector<2x192xf32> to vector<1x32xf32>
    %13 = vector.extract_strided_slice %9 {offsets = [1, 0], sizes = [1, 32], strides = [1, 1]} : vector<2x192xf32> to vector<1x32xf32>
    %14 = vector.extract_strided_slice %9 {offsets = [1, 32], sizes = [1, 32], strides = [1, 1]} : vector<2x192xf32> to vector<1x32xf32>
    %15 = vector.extract_strided_slice %9 {offsets = [1, 64], sizes = [1, 32], strides = [1, 1]} : vector<2x192xf32> to vector<1x32xf32>
    %16 = vector.extract_strided_slice %9 {offsets = [1, 96], sizes = [1, 32], strides = [1, 1]} : vector<2x192xf32> to vector<1x32xf32>
    %17 = vector.extract_strided_slice %9 {offsets = [1, 128], sizes = [1, 32], strides = [1, 1]} : vector<2x192xf32> to vector<1x32xf32>
    %cst = arith.constant dense<0.000000e+00> : vector<8x96xf32>
    %18 = tpu.matmul %0, %4, %cst {dimension_numbers = #tpu.dot_dimension_numbers<[1], [0], [0], [1], [0, 0, 1, 1], [], []>} : vector<8x32xf32>, vector<32x96xf32>, vector<8x96xf32> -> vector<8x96xf32>
    %19 = vector.broadcast %10 : vector<1x96xf32> to vector<8x96xf32>
    %20 = arith.addf %18, %19 : vector<8x96xf32>
    %21 = vector.extract_strided_slice %20 {offsets = [0, 0], sizes = [8, 24], strides = [1, 1]} : vector<8x96xf32> to vector<8x24xf32>
    %22 = vector.extract_strided_slice %20 {offsets = [0, 24], sizes = [8, 24], strides = [1, 1]} : vector<8x96xf32> to vector<8x24xf32>
    %23 = vector.extract_strided_slice %20 {offsets = [0, 48], sizes = [8, 24], strides = [1, 1]} : vector<8x96xf32> to vector<8x24xf32>
    %24 = vector.extract_strided_slice %20 {offsets = [0, 72], sizes = [8, 24], strides = [1, 1]} : vector<8x96xf32> to vector<8x24xf32>
    %25 = vector.shape_cast %21 : vector<8x24xf32> to vector<1x8x24xf32>
    %26 = vector.shape_cast %22 : vector<8x24xf32> to vector<1x8x24xf32>
    %27 = vector.shape_cast %23 : vector<8x24xf32> to vector<1x8x24xf32>
    %28 = vector.shape_cast %24 : vector<8x24xf32> to vector<1x8x24xf32>
    %29 = tpu.concatenate %25, %26, %27, %28 in 0 : vector<1x8x24xf32>, vector<1x8x24xf32>, vector<1x8x24xf32>, vector<1x8x24xf32> -> vector<4x8x24xf32>
    %30 = vector.extract_strided_slice %29 {offsets = [0, 0, 0], sizes = [4, 8, 8], strides = [1, 1, 1]} : vector<4x8x24xf32> to vector<4x8x8xf32>
    %31 = vector.extract_strided_slice %29 {offsets = [0, 0, 8], sizes = [4, 8, 8], strides = [1, 1, 1]} : vector<4x8x24xf32> to vector<4x8x8xf32>
    %32 = vector.extract_strided_slice %29 {offsets = [0, 0, 16], sizes = [4, 8, 8], strides = [1, 1, 1]} : vector<4x8x24xf32> to vector<4x8x8xf32>
    %cst_8 = arith.constant 1.000000e+00 : f32
    %33 = vector.broadcast %cst_8 : f32 to vector<8x8xf32>
    %34 = arith.subf %2, %33 : vector<8x8xf32>
    %cst_9 = arith.constant 1.000000e+09 : f32
    %35 = vector.broadcast %cst_9 : f32 to vector<8x8xf32>
    %36 = arith.mulf %34, %35 : vector<8x8xf32>
    "tpu.trace_start"() <{level = 10 : i32, message = "nqd,nkd->nqk"}> : () -> ()
    %cst_10 = arith.constant dense<0.000000e+00> : vector<4x8x8xf32>
    %37 = tpu.matmul %30, %31, %cst_10 {dimension_numbers = #tpu.dot_dimension_numbers<[2], [2], [1], [1], [0, 0, 0, 1, 1, 1], [0], [0]>} : vector<4x8x8xf32>, vector<4x8x8xf32>, vector<4x8x8xf32> -> vector<4x8x8xf32>
    "tpu.trace_stop"() : () -> ()
    %38 = vector.shape_cast %36 : vector<8x8xf32> to vector<1x8x8xf32>
    %39 = vector.broadcast %38 : vector<1x8x8xf32> to vector<4x8x8xf32>
    %40 = arith.addf %37, %39 : vector<4x8x8xf32>
    %cst_11 = arith.constant dense<0xFF800000> : vector<4x8xf32>
    %41 = vector.multi_reduction <maximumf>, %40, %cst_11 [2] : vector<4x8x8xf32> to vector<4x8xf32>
    %42 = vector.shape_cast %41 : vector<4x8xf32> to vector<4x8x1xf32>
    %43 = vector.broadcast %42 : vector<4x8x1xf32> to vector<4x8x8xf32>
    %44 = arith.subf %40, %43 : vector<4x8x8xf32>
    %45 = math.exp %44 : vector<4x8x8xf32>
    %cst_12 = arith.constant dense<0.000000e+00> : vector<4x8xf32>
    %46 = vector.multi_reduction <add>, %45, %cst_12 [2] : vector<4x8x8xf32> to vector<4x8xf32>
    %47 = vector.shape_cast %46 : vector<4x8xf32> to vector<4x8x1xf32>
    %cst_13 = arith.constant 1.000000e+00 : f32
    %48 = vector.broadcast %cst_13 : f32 to vector<4x8x1xf32>
    %49 = arith.divf %48, %47 : vector<4x8x1xf32>
    %50 = vector.broadcast %49 : vector<4x8x1xf32> to vector<4x8x8xf32>
    %51 = arith.mulf %45, %50 : vector<4x8x8xf32>
    "tpu.trace_start"() <{level = 10 : i32, message = "nqk,nkd->nqd"}> : () -> ()
    %cst_14 = arith.constant dense<0.000000e+00> : vector<4x8x8xf32>
    %52 = tpu.matmul %51, %32, %cst_14 {dimension_numbers = #tpu.dot_dimension_numbers<[2], [1], [1], [2], [0, 0, 0, 1, 1, 2], [0], [0]>} : vector<4x8x8xf32>, vector<4x8x8xf32>, vector<4x8x8xf32> -> vector<4x8x8xf32>
    "tpu.trace_stop"() : () -> ()
    "tpu.trace_start"() <{level = 10 : i32, message = "nsv,nvd->nsd"}> : () -> ()
    %cst_15 = arith.constant dense<0.000000e+00> : vector<4x8x32xf32>
    %53 = tpu.matmul %52, %7, %cst_15 {dimension_numbers = #tpu.dot_dimension_numbers<[2], [1], [1], [2], [0, 0, 0, 1, 1, 2], [0], [0]>} : vector<4x8x8xf32>, vector<4x8x32xf32>, vector<4x8x32xf32> -> vector<4x8x32xf32>
    "tpu.trace_stop"() : () -> ()
    %cst_16 = arith.constant dense<0.000000e+00> : vector<8x32xf32>
    %54 = vector.multi_reduction <add>, %53, %cst_16 [0] : vector<4x8x32xf32> to vector<8x32xf32>
    %55 = vector.broadcast %12 : vector<1x32xf32> to vector<8x32xf32>
    %56 = arith.addf %54, %55 : vector<8x32xf32>
    %57 = arith.addf %56, %0 : vector<8x32xf32>
    %cst_17 = arith.constant dense<0.000000e+00> : vector<8xf32>
    %58 = vector.multi_reduction <add>, %57, %cst_17 [1] : vector<8x32xf32> to vector<8xf32>
    %59 = vector.shape_cast %58 : vector<8xf32> to vector<8x1xf32>
    %cst_18 = arith.constant 3.200000e+01 : f32
    %60 = vector.broadcast %cst_18 : f32 to vector<8x1xf32>
    %61 = arith.divf %59, %60 : vector<8x1xf32>
    %62 = vector.broadcast %61 : vector<8x1xf32> to vector<8x32xf32>
    %63 = arith.subf %57, %62 : vector<8x32xf32>
    %64 = arith.mulf %63, %63 : vector<8x32xf32>
    %cst_19 = arith.constant dense<0.000000e+00> : vector<8xf32>
    %65 = vector.multi_reduction <add>, %64, %cst_19 [1] : vector<8x32xf32> to vector<8xf32>
    %66 = vector.shape_cast %65 : vector<8xf32> to vector<8x1xf32>
    %cst_20 = arith.constant 3.200000e+01 : f32
    %67 = vector.broadcast %cst_20 : f32 to vector<8x1xf32>
    %68 = arith.divf %66, %67 : vector<8x1xf32>
    %69 = vector.broadcast %61 : vector<8x1xf32> to vector<8x32xf32>
    %70 = arith.subf %57, %69 : vector<8x32xf32>
    %cst_21 = arith.constant 9.99999974E-6 : f32
    %71 = vector.broadcast %cst_21 : f32 to vector<8x1xf32>
    %72 = arith.addf %68, %71 : vector<8x1xf32>
    %73 = math.rsqrt %72 : vector<8x1xf32>
    %74 = vector.broadcast %73 : vector<8x1xf32> to vector<8x32xf32>
    %75 = arith.mulf %70, %74 : vector<8x32xf32>
    %76 = vector.broadcast %14 : vector<1x32xf32> to vector<8x32xf32>
    %77 = arith.mulf %75, %76 : vector<8x32xf32>
    %78 = vector.broadcast %15 : vector<1x32xf32> to vector<8x32xf32>
    %79 = arith.addf %77, %78 : vector<8x32xf32>
    %cst_22 = arith.constant dense<0.000000e+00> : vector<8x64xf32>
    %80 = tpu.matmul %79, %5, %cst_22 {dimension_numbers = #tpu.dot_dimension_numbers<[1], [0], [0], [1], [0, 0, 1, 1], [], []>} : vector<8x32xf32>, vector<32x64xf32>, vector<8x64xf32> -> vector<8x64xf32>
    %81 = vector.broadcast %11 : vector<1x64xf32> to vector<8x64xf32>
    %82 = arith.addf %80, %81 : vector<8x64xf32>
    %cst_23 = arith.constant 0.000000e+00 : f32
    %83 = vector.broadcast %cst_23 : f32 to vector<8x64xf32>
    %84 = arith.maximumf %82, %83 : vector<8x64xf32>
    %cst_24 = arith.constant dense<0.000000e+00> : vector<8x32xf32>
    %85 = tpu.matmul %84, %8, %cst_24 {dimension_numbers = #tpu.dot_dimension_numbers<[1], [0], [0], [1], [0, 0, 1, 1], [], []>} : vector<8x64xf32>, vector<64x32xf32>, vector<8x32xf32> -> vector<8x32xf32>
    %86 = vector.broadcast %13 : vector<1x32xf32> to vector<8x32xf32>
    %87 = arith.addf %85, %86 : vector<8x32xf32>
    %88 = arith.addf %87, %79 : vector<8x32xf32>
    %cst_25 = arith.constant dense<0.000000e+00> : vector<8xf32>
    %89 = vector.multi_reduction <add>, %88, %cst_25 [1] : vector<8x32xf32> to vector<8xf32>
    %90 = vector.shape_cast %89 : vector<8xf32> to vector<8x1xf32>
    %cst_26 = arith.constant 3.200000e+01 : f32
    %91 = vector.broadcast %cst_26 : f32 to vector<8x1xf32>
    %92 = arith.divf %90, %91 : vector<8x1xf32>
    %93 = vector.broadcast %92 : vector<8x1xf32> to vector<8x32xf32>
    %94 = arith.subf %88, %93 : vector<8x32xf32>
    %95 = arith.mulf %94, %94 : vector<8x32xf32>
    %cst_27 = arith.constant dense<0.000000e+00> : vector<8xf32>
    %96 = vector.multi_reduction <add>, %95, %cst_27 [1] : vector<8x32xf32> to vector<8xf32>
    %97 = vector.shape_cast %96 : vector<8xf32> to vector<8x1xf32>
    %cst_28 = arith.constant 3.200000e+01 : f32
    %98 = vector.broadcast %cst_28 : f32 to vector<8x1xf32>
    %99 = arith.divf %97, %98 : vector<8x1xf32>
    %100 = vector.broadcast %92 : vector<8x1xf32> to vector<8x32xf32>
    %101 = arith.subf %88, %100 : vector<8x32xf32>
    %cst_29 = arith.constant 9.99999974E-6 : f32
    %102 = vector.broadcast %cst_29 : f32 to vector<8x1xf32>
    %103 = arith.addf %99, %102 : vector<8x1xf32>
    %104 = math.rsqrt %103 : vector<8x1xf32>
    %105 = vector.broadcast %104 : vector<8x1xf32> to vector<8x32xf32>
    %106 = arith.mulf %101, %105 : vector<8x32xf32>
    %107 = vector.broadcast %16 : vector<1x32xf32> to vector<8x32xf32>
    %108 = arith.mulf %106, %107 : vector<8x32xf32>
    %109 = vector.broadcast %17 : vector<1x32xf32> to vector<8x32xf32>
    %110 = arith.addf %108, %109 : vector<8x32xf32>
    %c0_30 = arith.constant 0 : index
    %c0_31 = arith.constant 0 : index
    %111 = vector.load %arg4[%c0_30, %c0_31] : memref<8x32xf32, #tpu.memory_space<vmem>>, vector<8x32xf32>
    tpu.vector_store %arg4[%c0_30, %c0_31], %110 {strides = array<i32>} : memref<8x32xf32, #tpu.memory_space<vmem>>, vector<8x32xf32>,
    return
  }
  func.func @transform_0(%arg0: i32) -> (i32, i32) {
    %c0_i32 = arith.constant 0 : i32
    %c0_i32_0 = arith.constant 0 : i32
    return %arg0, %c0_i32 : i32, i32
  }
  func.func @transform_1(%arg0: i32) -> (i32, i32, i32) {
    %c0_i32 = arith.constant 0 : i32
    %c0_i32_0 = arith.constant 0 : i32
    %c0_i32_1 = arith.constant 0 : i32
    return %arg0, %c0_i32, %c0_i32_0 : i32, i32, i32
  }
  func.func @transform_2(%arg0: i32) -> (i32, i32) {
    %c0_i32 = arith.constant 0 : i32
    %c0_i32_0 = arith.constant 0 : i32
    %c0_i32_1 = arith.constant 0 : i32
    return %c0_i32, %c0_i32_0 : i32, i32
  }
  func.func @transform_3(%arg0: i32) -> (i32, i32) {
    %c0_i32 = arith.constant 0 : i32
    %c0_i32_0 = arith.constant 0 : i32
    return %arg0, %c0_i32 : i32, i32
  }
}

</mosaic_0001>

<llo_original>
// kernel: tpu_custom_call.1
$region0: #{tpu_custom_call.1}
  #allocation0 [shape = 'u32[]', space=smem, size = 0x4, offset = 0x4, fixed_abs, tag = 'smem constant byte address 0x4 - core index']
  #allocation1 [shape = 'u32[144,128]{1,0:T(1,128)}', space=vmem, size = 0x12000, scoped, tag = 'internal scratch']
  %s0 = inlined_call_operand.vmem [shape: f32[16,32], index: 0, kind: input, shape index: {}]
  %s1 = inlined_call_operand.vmem [shape: f32[2,8,8], index: 1, kind: input, shape index: {}]
  %s2 = inlined_call_operand.vmem [shape: f32[98,192], index: 2, kind: input, shape index: {}]
  %s3 = inlined_call_operand.hbm [shape: f32[16,32], index: 3, kind: output, shape index: {}]
  %s4 = sld [smem:[#allocation0]]
  $region45: #{tpu_custom_call.1} parent=0
    _
  %s6 = ssub.s32 1, %s4
  %s7 = scalar_select 0, %s6, %s4
  $region1: #{tpu_custom_call.1} parent=0
    #allocation2 [shape = 'u8[8192]{0}', space=vmem, size = 0x2000, scoped, tag = 'output window, operand 0']
    #allocation3 [shape = 's32[2]{0}', space=sflag, size = 0x8, scoped, tag = 'scoped memory for tpu_custom_call.1']
    %8 = vsyncpa [#allocation3], 0
    %s9 = scalar_lea.sflag [#allocation3], 1
    %10 = vsyncpa %s9, 0
    loop: start=0, step=1, limit=4
    $region2: #{tpu_custom_call.1} parent=1 // loop_pre_header
      _
    $region3: #{tpu_custom_call.1} parent=1 // loop_header
      %s12 = sphi 0, %s16
      %p13 = scmp.ge.s32.totalorder %s12, 4
      %s22 = sphi 0, %s24
      %s25 = sphi 0, %s22
      %s26 = sphi 0, %s25
      %s42 = sphi 0, %s26
      %s48 = sphi 0, %s50
      %s51 = sphi 0, %s48
      %s52 = sphi 0, %s51
      %s68 = sphi 0, %s52
      %s72 = sphi 0, %s72
      %s74 = sphi 0, %s72
      %s75 = sphi 0, %s74
      %s89 = sphi 0, %s75
      %s95 = sphi 0, %s97
      %s98 = sphi 0, %s95
      %s99 = sphi 0, %s98
      %s115 = sphi 0, %s99
    $region4: #{tpu_custom_call.1} parent=1 // loop_header_branch
      %15 = sbr.rel (%p13) target = $region8
    $region5: #{tpu_custom_call.1} parent=1 // loop_body
      %s17 = ssub.s32 %s12, 1
      %s18 = ssub.s32 %s12, 2
      %s19 = sadd.s32 %s12, 1
      %s20 = ssub.s32 %s12, %s19
      %p21 = scmp.eq.s32.totalorder %s20, 0
      %s23 = sadd.s32 %s22, 1
      %s24 = scalar_select %p21, %s22, %s23
      %p27 = pneg %p21
      %p28 = scmp.eq.s32.totalorder %s12, 1
      %p29 = por %p27, %p28
      %p30 = scmp.ne.s32.totalorder %s22, %s25
      %p31 = scmp.eq.s32.totalorder %s12, 0
      %p32 = por %p30, %p31
      %p33 = scmp.ne.s32.totalorder %s22, %s25
      %p34 = scmp.eq.s32.totalorder %s17, 1
      %p35 = por %p33, %p34
      %p36 = scmp.ne.s32.totalorder %s25, %s26
      %p37 = scmp.eq.s32.totalorder %s17, 0
      %p38 = por %p36, %p37
      %p39 = scmp.ne.s32.totalorder %s25, %s26
      %p40 = scmp.eq.s32.totalorder %s18, 1
      %p41 = por %p39, %p40
      %p43 = scmp.ne.s32.totalorder %s26, %s42
      %p44 = scmp.eq.s32.totalorder %s18, 0
      %p45 = por %p43, %p44
      %s46 = ssub.s32 %s12, %s19
      %p47 = scmp.eq.s32.totalorder %s46, 0
      %s49 = sadd.s32 %s48, 1
      %s50 = scalar_select %p47, %s48, %s49
      %p53 = pneg %p47
      %p54 = scmp.eq.s32.totalorder %s12, 1
      %p55 = por %p53, %p54
      %p56 = scmp.ne.s32.totalorder %s48, %s51
      %p57 = scmp.eq.s32.totalorder %s12, 0
      %p58 = por %p56, %p57
      %p59 = scmp.ne.s32.totalorder %s48, %s51
      %p60 = scmp.eq.s32.totalorder %s17, 1
      %p61 = por %p59, %p60
      %p62 = scmp.ne.s32.totalorder %s51, %s52
      %p63 = scmp.eq.s32.totalorder %s17, 0
      %p64 = por %p62, %p63
      %p65 = scmp.ne.s32.totalorder %s51, %s52
      %p66 = scmp.eq.s32.totalorder %s18, 1
      %p67 = por %p65, %p66
      %p69 = scmp.ne.s32.totalorder %s52, %s68
      %p70 = scmp.eq.s32.totalorder %s18, 0
      %p71 = por %p69, %p70
      %s73 = sadd.s32 %s72, 1
      %p76 = scmp.eq.s32.totalorder %s12, 1
      %p77 = scmp.ne.s32.totalorder %s72, %s74
      %p78 = scmp.eq.s32.totalorder %s12, 0
      %p79 = por %p77, %p78
      %p80 = scmp.ne.s32.totalorder %s72, %s74
      %p81 = scmp.eq.s32.totalorder %s17, 1
      %p82 = por %p80, %p81
      %p83 = scmp.ne.s32.totalorder %s74, %s75
      %p84 = scmp.eq.s32.totalorder %s17, 0
      %p85 = por %p83, %p84
      %p86 = scmp.ne.s32.totalorder %s74, %s75
      %p87 = scmp.eq.s32.totalorder %s18, 1
      %p88 = por %p86, %p87
      %p90 = scmp.ne.s32.totalorder %s75, %s89
      %p91 = scmp.eq.s32.totalorder %s18, 0
      %p92 = por %p90, %p91
      %s93 = ssub.s32 %s12, %s19
      %p94 = scmp.eq.s32.totalorder %s93, 0
      %s96 = sadd.s32 %s95, 1
      %s97 = scalar_select %p94, %s95, %s96
      %p100 = pneg %p94
      %p101 = scmp.eq.s32.totalorder %s12, 1
      %p102 = por %p100, %p101
      %p103 = scmp.ne.s32.totalorder %s95, %s98
      %p104 = scmp.eq.s32.totalorder %s12, 0
      %p105 = por %p103, %p104
      %p106 = scmp.ne.s32.totalorder %s95, %s98
      %p107 = scmp.eq.s32.totalorder %s17, 1
      %p108 = por %p106, %p107
      %p109 = scmp.ne.s32.totalorder %s98, %s99
      %p110 = scmp.eq.s32.totalorder %s17, 0
      %p111 = por %p109, %p110
      %p112 = scmp.ne.s32.totalorder %s98, %s99
      %p113 = scmp.eq.s32.totalorder %s18, 1
      %p114 = por %p112, %p113
      %p116 = scmp.ne.s32.totalorder %s99, %s115
      %p117 = scmp.eq.s32.totalorder %s18, 0
      %p118 = por %p116, %p117
      %p119 = scmp.le.s32.totalorder 1, %s12
      %p120 = scmp.lt.s32.totalorder %s12, 3
      %p121 = pnand %p119, %p120
      %p122 = pneg %p121
      // Predicated region
      $region9: #{tpu_custom_call.1} parent=5 // pred_check
        _
      $region10: #{tpu_custom_call.1} parent=5 // pred_check_branch
        %124 = sbr.rel (%p121) target = $region12
      $region11: #{tpu_custom_call.1} parent=5 // pred_region
        %s125 = ssub.s32 %s12, 1
        // Predicated region
        $region13: #{tpu_custom_call.1} parent=11 // pred_check
          %p126 = pneg %p85
        $region14: #{tpu_custom_call.1} parent=11 // pred_check_branch
          %128 = sbr.rel (%p126) target = $region16
        $region15: #{tpu_custom_call.1} parent=11 // pred_region
          _
        $region16: #{tpu_custom_call.1} parent=11 // pred_fallthru
          _
      $region12: #{tpu_custom_call.1} parent=5 // pred_fallthru
        _
      %p129 = scmp.lt.s32.totalorder %s12, 2
      // Predicated region
      $region17: #{tpu_custom_call.1} parent=5 // pred_check
        %p130 = pneg %p129
      $region18: #{tpu_custom_call.1} parent=5 // pred_check_branch
        %132 = sbr.rel (%p130) target = $region20
      $region19: #{tpu_custom_call.1} parent=5 // pred_region
        // Predicated region
        $region21: #{tpu_custom_call.1} parent=19 // pred_check
          %p133 = pneg %p32
        $region22: #{tpu_custom_call.1} parent=19 // pred_check_branch
          %135 = sbr.rel (%p133) target = $region24
        $region23: #{tpu_custom_call.1} parent=19 // pred_region
          %p136 = scmp.lt.s32.totalorder %s12, 1
          %s137 = scalar_select %p136, %s12, 1
          %s138 = smul.addr %s137, 8
          %s139 = scalar_lea.vmem %s0, %s138
        $region24: #{tpu_custom_call.1} parent=19 // pred_fallthru
          _
        // Predicated region
        $region25: #{tpu_custom_call.1} parent=19 // pred_check
          %p140 = pneg %p58
        $region26: #{tpu_custom_call.1} parent=19 // pred_check_branch
          %142 = sbr.rel (%p140) target = $region28
        $region27: #{tpu_custom_call.1} parent=19 // pred_region
          %p143 = scmp.lt.s32.totalorder %s12, 1
          %s144 = scalar_select %p143, %s12, 1
          %s145 = smul.addr %s144, 8
          %s146 = scalar_lea.vmem %s1, %s145
        $region28: #{tpu_custom_call.1} parent=19 // pred_fallthru
          _
      $region20: #{tpu_custom_call.1} parent=5 // pred_fallthru
        _
      %p147 = scmp.le.s32.totalorder 1, %s12
      %p148 = scmp.lt.s32.totalorder %s12, 3
      %p149 = pnand %p147, %p148
      %p150 = pneg %p149
      // Predicated region
      $region29: #{tpu_custom_call.1} parent=5 // pred_check
        _
      $region30: #{tpu_custom_call.1} parent=5 // pred_check_branch
        %152 = sbr.rel (%p149) target = $region32
      $region31: #{tpu_custom_call.1} parent=5 // pred_region
        %s153 = ssub.s32 %s12, 1
        %p154 = scmp.lt.s32.totalorder %s17, 1
        %s155 = scalar_select %p154, %s17, 1
        %s156 = smul.addr %s155, 8
        %s157 = scalar_lea.vmem %s0, %s156
        %p158 = pneg %p38
        %p159 = pneg %p35
        %p160 = scmp.lt.s32.totalorder %s17, 1
        %s161 = scalar_select %p160, %s17, 1
        %s162 = smul.addr %s161, 8
        %s163 = scalar_lea.vmem %s1, %s162
        %p164 = pneg %p64
        %p165 = pneg %p61
        %p166 = pneg %p85
        %p167 = pneg %p82
        %p168 = pneg %p111
        %p169 = pneg %p108
        %s170 = sand.u32 %s98, 1
        %s171 = scalar_lea.sflag [#allocation3], %s170
        %s172 = sand.u32 %s98, 1
        %s173 = smul.addr %s172, 8
        %s174 = scalar_lea.vmem [#allocation2], %s173
        %p175 = scmp.lt.s32.totalorder %s17, 1
        %s176 = scalar_select %p175, %s17, 1
        %s177 = smul.addr %s176, 8
        %s178 = scalar_lea.vmem %s0, %s177
        %p179 = scmp.lt.s32.totalorder %s17, 1
        %s180 = scalar_select %p179, %s17, 1
        %s181 = smul.addr %s180, 8
        %s182 = scalar_lea.vmem %s1, %s181
        %v183 = vld [vmem:[%s178] sm:$0xff]
        %v184 = vld [vmem:[%s182] sm:$0xff]
        %v185 = vld [vmem:[%s2] sm:$0xff]
        %v186 = vld [vmem:[%s2 + $0x8] sm:$0xff]
        %v187 = vld [vmem:[%s2 + $0x10] sm:$0xff]
        %v188 = vld [vmem:[%s2 + $0x18] sm:$0xff]
        %v189 = vld [vmem:[%s2 + $0x20] sm:$0xff]
        %v190 = vld [vmem:[%s2 + $0x28] sm:$0xff]
        %v191 = vld [vmem:[%s2 + $0x30] sm:$0xff]
        %v192 = vld [vmem:[%s2 + $0x38] sm:$0xff]
        %v193 = vld [vmem:[%s2 + $0x40] sm:$0xff]
        %v194 = vld [vmem:[%s2 + $0x50] sm:$0xff]
        %v195 = vld [vmem:[%s2 + $0x60] sm:$0xff]
        %v196 = vld [vmem:[%s2 + $0x70] sm:$0xff]
        %v197 = vld [vmem:[%s2 + $0x80] sm:$0xff]
        %v198 = vld [vmem:[%s2 + $0x90] sm:$0xff]
        %v199 = vld [vmem:[%s2 + $0xa0] sm:$0xff]
        %v200 = vld [vmem:[%s2 + $0xb0] sm:$0xff]
        %v201 = vld [vmem:[%s2 + $0xc0] sm:$0x3]
        %v202 = vld [vmem:[%s2 + $0xc8] sm:$0x3]
        %v203 = vlaneseq
        %v204 = vshrl.u32 %v203, 7
        %v205 = vsub.s32 0, %v204
        %v206 = vrot.slane %v201, %v205
        %vm207 = vcmask 261120
        %v209 = vsel %vm207, %v183, 0
        %211 = vmatprep.subr.mxu0 0.0
        %212 = vmatpush1.msra.mxu0 0.0
        %213 = vmatprep.subr.mxu0 0.0
        %214 = vmatpush1.msra.mxu0 0.0
        %215 = vmatprep.subr.mxu0 0.0
        %216 = vmatpush1.msra.mxu0 0.0
        %217 = vmatprep.subr.mxu0 0.0
        %218 = vmatpush1.msra.mxu0 0.0
        %219 = vmatprep.subr.mxu0 0.0
        %220 = vmatpush1.msra.mxu0 0.0
        %221 = vmatprep.subr.mxu0 0.0
        %222 = vmatpush1.msra.mxu0 0.0
        %223 = vmatprep.subr.mxu0 0.0
        %224 = vmatpush1.msra.mxu0 0.0
        %225 = vmatprep.subr.mxu0 0.0
        %226 = vmatpush1.msra.mxu0 0.0
        %227 = vmatprep.subr.mxu0 0.0
        %228 = vmatpush1.msra.mxu0 0.0
        %229 = vmatprep.subr.mxu0 0.0
        %230 = vmatpush1.msra.mxu0 0.0
        %231 = vmatprep.subr.mxu0 0.0
        %232 = vmatpush1.msra.mxu0 0.0
        %233 = vmatprep.subr.mxu0 0.0
        %234 = vmatpush1.msra.mxu0 0.0
        %235 = vmatprep.subr.mxu0 0.0
        %236 = vmatpush1.msra.mxu0 %v191
        %237 = vmatprep.subr.mxu0 0.0
        %238 = vmatpush1.msra.mxu0 %v189
        %239 = vmatprep.subr.mxu0 0.0
        %240 = vmatpush1.msra.mxu0 %v187
        %241 = vmatprep.subr.mxu0 0.0
        %242 = vmatpush1.msra.mxu0 %v185
        %243 = vmatprep.subr.mxu0 0.0
        %244 = vmatpush2.msra.mxu0 0.0
        %245 = vmatprep.subr.mxu0 0.0
        %246 = vmatpush2.msra.mxu0 0.0
        %247 = vmatprep.subr.mxu0 0.0
        %248 = vmatpush2.msra.mxu0 0.0
        %249 = vmatprep.subr.mxu0 0.0
        %250 = vmatpush2.msra.mxu0 0.0
        %251 = vmatprep.subr.mxu0 0.0
        %252 = vmatpush2.msra.mxu0 0.0
        %253 = vmatprep.subr.mxu0 0.0
        %254 = vmatpush2.msra.mxu0 0.0
        %255 = vmatprep.subr.mxu0 0.0
        %256 = vmatpush2.msra.mxu0 0.0
        %257 = vmatprep.subr.mxu0 0.0
        %258 = vmatpush2.msra.mxu0 0.0
        %259 = vmatprep.subr.mxu0 0.0
        %260 = vmatpush2.msra.mxu0 0.0
        %261 = vmatprep.subr.mxu0 0.0
        %262 = vmatpush2.msra.mxu0 0.0
        %263 = vmatprep.subr.mxu0 0.0
        %264 = vmatpush2.msra.mxu0 0.0
        %265 = vmatprep.subr.mxu0 0.0
        %266 = vmatpush2.msra.mxu0 0.0
        %267 = vmatprep.subr.mxu0 0.0
        %268 = vmatpush2.msra.mxu0 0.0
        %269 = vmatprep.subr.mxu0 0.0
        %270 = vmatpush2.msra.mxu0 0.0
        %271 = vmatprep.subr.mxu0 0.0
        %272 = vmatpush2.msra.mxu0 0.0
        %273 = vmatprep.subr.mxu0 0.0
        %274 = vmatpush2.msra.mxu0 0.0
        %275 = vmatprep.mubr.f32.mxu0 0.0
        %276 = vmatmul.mubr.f32.gmra.mxu0 %v209
        %v277 = vpop.f32.mrf.mxu0
        %v278 = vadd.f32 %v206, %v277
        %v279 = vpop.f32.mrf.mxu0
        %280 = vdwg.mxu0
        %282 = vrot.lane.b32.xlu0 %v278, 104
        %v283 = vpop.permute.xlu0 %282
        %284 = vrot.lane.b32.xlu0 %v278, 80
        %v285 = vpop.permute.xlu0 %284
        %286 = vrot.lane.b32.xlu0 %v278, 56
        %v287 = vpop.permute.xlu0 %286
        %v288 = vsub.f32 %v184, 1.0
        %v289 = vmul.f32 %v288, 1e+09
        %290 = vrot.lane.b32.xlu0 %v278, 120
        %v291 = vpop.permute.xlu0 %290
        %vm292 = vcmask 64512
        %v293 = vsel %vm292, %v278, 0
        %v295 = vsel %vm292, %v291, 0
        %297 = vmatprep.subr.mxu0 0.0
        %298 = vmatpush1.xpose.msra.mxu0 0.0
        %299 = vmatprep.subr.mxu0 0.0
        %300 = vmatpush1.xpose.msra.mxu0 0.0
        %301 = vmatprep.subr.mxu0 0.0
        %302 = vmatpush1.xpose.msra.mxu0 0.0
        %303 = vmatprep.subr.mxu0 0.0
        %304 = vmatpush1.xpose.msra.mxu0 0.0
        %305 = vmatprep.subr.mxu0 0.0
        %306 = vmatpush1.xpose.msra.mxu0 0.0
        %307 = vmatprep.subr.mxu0 0.0
        %308 = vmatpush1.xpose.msra.mxu0 0.0
        %309 = vmatprep.subr.mxu0 0.0
        %310 = vmatpush1.xpose.msra.mxu0 0.0
        %311 = vmatprep.subr.mxu0 0.0
        %312 = vmatpush1.xpose.msra.mxu0 0.0
        %313 = vmatprep.subr.mxu0 0.0
        %314 = vmatpush1.xpose.msra.mxu0 0.0
        %315 = vmatprep.subr.mxu0 0.0
        %316 = vmatpush1.xpose.msra.mxu0 0.0
        %317 = vmatprep.subr.mxu0 0.0
        %318 = vmatpush1.xpose.msra.mxu0 0.0
        %319 = vmatprep.subr.mxu0 0.0
        %320 = vmatpush1.xpose.msra.mxu0 0.0
        %321 = vmatprep.subr.mxu0 0.0
        %322 = vmatpush1.xpose.msra.mxu0 0.0
        %323 = vmatprep.subr.mxu0 0.0
        %324 = vmatpush1.xpose.msra.mxu0 0.0
        %325 = vmatprep.subr.mxu0 0.0
        %326 = vmatpush1.xpose.msra.mxu0 0.0
        %327 = vmatprep.subr.mxu0 0.0
        %328 = vmatpush1.xpose.msra.mxu0 %v295
        %329 = vmatprep.subr.mxu0 0.0
        %330 = vmatpush2.xpose.msra.mxu0 0.0
        %331 = vmatprep.subr.mxu0 0.0
        %332 = vmatpush2.xpose.msra.mxu0 0.0
        %333 = vmatprep.subr.mxu0 0.0
        %334 = vmatpush2.xpose.msra.mxu0 0.0
        %335 = vmatprep.subr.mxu0 0.0
        %336 = vmatpush2.xpose.msra.mxu0 0.0
        %337 = vmatprep.subr.mxu0 0.0
        %338 = vmatpush2.xpose.msra.mxu0 0.0
        %339 = vmatprep.subr.mxu0 0.0
        %340 = vmatpush2.xpose.msra.mxu0 0.0
        %341 = vmatprep.subr.mxu0 0.0
        %342 = vmatpush2.xpose.msra.mxu0 0.0
        %343 = vmatprep.subr.mxu0 0.0
        %344 = vmatpush2.xpose.msra.mxu0 0.0
        %345 = vmatprep.subr.mxu0 0.0
        %346 = vmatpush2.xpose.msra.mxu0 0.0
        %347 = vmatprep.subr.mxu0 0.0
        %348 = vmatpush2.xpose.msra.mxu0 0.0
        %349 = vmatprep.subr.mxu0 0.0
        %350 = vmatpush2.xpose.msra.mxu0 0.0
        %351 = vmatprep.subr.mxu0 0.0
        %352 = vmatpush2.xpose.msra.mxu0 0.0
        %353 = vmatprep.subr.mxu0 0.0
        %354 = vmatpush2.xpose.msra.mxu0 0.0
        %355 = vmatprep.subr.mxu0 0.0
        %356 = vmatpush2.xpose.msra.mxu0 0.0
        %357 = vmatprep.subr.mxu0 0.0
        %358 = vmatpush2.xpose.msra.mxu0 0.0
        %359 = vmatprep.subr.mxu0 0.0
        %360 = vmatpush2.xpose.msra.mxu0 0.0
        %361 = vmatprep.mubr.f32.mxu0 0.0
        %362 = vmatmul.mubr.f32.gmra.mxu0 %v293
        %v363 = vpop.f32.mrf.mxu0
        %v364 = vadd.f32 %v289, %v363
        %v365 = vpop.f32.mrf.mxu0
        %366 = vdwg.mxu0
        %367 = vrot.lane.b32.xlu0 %v283, 120
        %v368 = vpop.permute.xlu0 %367
        %v369 = vsel %vm292, %v283, 0
        %v371 = vsel %vm292, %v368, 0
        %373 = vmatprep.subr.mxu0 0.0
        %374 = vmatpush1.xpose.msra.mxu0 0.0
        %375 = vmatprep.subr.mxu0 0.0
        %376 = vmatpush1.xpose.msra.mxu0 0.0
        %377 = vmatprep.subr.mxu0 0.0
        %378 = vmatpush1.xpose.msra.mxu0 0.0
        %379 = vmatprep.subr.mxu0 0.0
        %380 = vmatpush1.xpose.msra.mxu0 0.0
        %381 = vmatprep.subr.mxu0 0.0
        %382 = vmatpush1.xpose.msra.mxu0 0.0
        %383 = vmatprep.subr.mxu0 0.0
        %384 = vmatpush1.xpose.msra.mxu0 0.0
        %385 = vmatprep.subr.mxu0 0.0
        %386 = vmatpush1.xpose.msra.mxu0 0.0
        %387 = vmatprep.subr.mxu0 0.0
        %388 = vmatpush1.xpose.msra.mxu0 0.0
        %389 = vmatprep.subr.mxu0 0.0
        %390 = vmatpush1.xpose.msra.mxu0 0.0
        %391 = vmatprep.subr.mxu0 0.0
        %392 = vmatpush1.xpose.msra.mxu0 0.0
        %393 = vmatprep.subr.mxu0 0.0
        %394 = vmatpush1.xpose.msra.mxu0 0.0
        %395 = vmatprep.subr.mxu0 0.0
        %396 = vmatpush1.xpose.msra.mxu0 0.0
        %397 = vmatprep.subr.mxu0 0.0
        %398 = vmatpush1.xpose.msra.mxu0 0.0
        %399 = vmatprep.subr.mxu0 0.0
        %400 = vmatpush1.xpose.msra.mxu0 0.0
        %401 = vmatprep.subr.mxu0 0.0
        %402 = vmatpush1.xpose.msra.mxu0 0.0
        %403 = vmatprep.subr.mxu0 0.0
        %404 = vmatpush1.xpose.msra.mxu0 %v371
        %405 = vmatprep.subr.mxu0 0.0
        %406 = vmatpush2.xpose.msra.mxu0 0.0
        %407 = vmatprep.subr.mxu0 0.0
        %408 = vmatpush2.xpose.msra.mxu0 0.0
        %409 = vmatprep.subr.mxu0 0.0
        %410 = vmatpush2.xpose.msra.mxu0 0.0
        %411 = vmatprep.subr.mxu0 0.0
        %412 = vmatpush2.xpose.msra.mxu0 0.0
        %413 = vmatprep.subr.mxu0 0.0
        %414 = vmatpush2.xpose.msra.mxu0 0.0
        %415 = vmatprep.subr.mxu0 0.0
        %416 = vmatpush2.xpose.msra.mxu0 0.0
        %417 = vmatprep.subr.mxu0 0.0
        %418 = vmatpush2.xpose.msra.mxu0 0.0
        %419 = vmatprep.subr.mxu0 0.0
        %420 = vmatpush2.xpose.msra.mxu0 0.0
        %421 = vmatprep.subr.mxu0 0.0
        %422 = vmatpush2.xpose.msra.mxu0 0.0
        %423 = vmatprep.subr.mxu0 0.0
        %424 = vmatpush2.xpose.msra.mxu0 0.0
        %425 = vmatprep.subr.mxu0 0.0
        %426 = vmatpush2.xpose.msra.mxu0 0.0
        %427 = vmatprep.subr.mxu0 0.0
        %428 = vmatpush2.xpose.msra.mxu0 0.0
        %429 = vmatprep.subr.mxu0 0.0
        %430 = vmatpush2.xpose.msra.mxu0 0.0
        %431 = vmatprep.subr.mxu0 0.0
        %432 = vmatpush2.xpose.msra.mxu0 0.0
        %433 = vmatprep.subr.mxu0 0.0
        %434 = vmatpush2.xpose.msra.mxu0 0.0
        %435 = vmatprep.subr.mxu0 0.0
        %436 = vmatpush2.xpose.msra.mxu0 0.0
        %437 = vmatprep.mubr.f32.mxu0 0.0
        %438 = vmatmul.mubr.f32.gmra.mxu0 %v369
        %v439 = vpop.f32.mrf.mxu0
        %v440 = vadd.f32 %v289, %v439
        %v441 = vpop.f32.mrf.mxu0
        %442 = vdwg.mxu0
        %443 = vrot.lane.b32.xlu0 %v285, 120
        %v444 = vpop.permute.xlu0 %443
        %v445 = vsel %vm292, %v285, 0
        %v447 = vsel %vm292, %v444, 0
        %449 = vmatprep.subr.mxu0 0.0
        %450 = vmatpush1.xpose.msra.mxu0 0.0
        %451 = vmatprep.subr.mxu0 0.0
        %452 = vmatpush1.xpose.msra.mxu0 0.0
        %453 = vmatprep.subr.mxu0 0.0
        %454 = vmatpush1.xpose.msra.mxu0 0.0
        %455 = vmatprep.subr.mxu0 0.0
        %456 = vmatpush1.xpose.msra.mxu0 0.0
        %457 = vmatprep.subr.mxu0 0.0
        %458 = vmatpush1.xpose.msra.mxu0 0.0
        %459 = vmatprep.subr.mxu0 0.0
        %460 = vmatpush1.xpose.msra.mxu0 0.0
        %461 = vmatprep.subr.mxu0 0.0
        %462 = vmatpush1.xpose.msra.mxu0 0.0
        %463 = vmatprep.subr.mxu0 0.0
        %464 = vmatpush1.xpose.msra.mxu0 0.0
        %465 = vmatprep.subr.mxu0 0.0
        %466 = vmatpush1.xpose.msra.mxu0 0.0
        %467 = vmatprep.subr.mxu0 0.0
        %468 = vmatpush1.xpose.msra.mxu0 0.0
        %469 = vmatprep.subr.mxu0 0.0
        %470 = vmatpush1.xpose.msra.mxu0 0.0
        %471 = vmatprep.subr.mxu0 0.0
        %472 = vmatpush1.xpose.msra.mxu0 0.0
        %473 = vmatprep.subr.mxu0 0.0
        %474 = vmatpush1.xpose.msra.mxu0 0.0
        %475 = vmatprep.subr.mxu0 0.0
        %476 = vmatpush1.xpose.msra.mxu0 0.0
        %477 = vmatprep.subr.mxu0 0.0
        %478 = vmatpush1.xpose.msra.mxu0 0.0
        %479 = vmatprep.subr.mxu0 0.0
        %480 = vmatpush1.xpose.msra.mxu0 %v447
        %481 = vmatprep.subr.mxu0 0.0
        %482 = vmatpush2.xpose.msra.mxu0 0.0
        %483 = vmatprep.subr.mxu0 0.0
        %484 = vmatpush2.xpose.msra.mxu0 0.0
        %485 = vmatprep.subr.mxu0 0.0
        %486 = vmatpush2.xpose.msra.mxu0 0.0
        %487 = vmatprep.subr.mxu0 0.0
        %488 = vmatpush2.xpose.msra.mxu0 0.0
        %489 = vmatprep.subr.mxu0 0.0
        %490 = vmatpush2.xpose.msra.mxu0 0.0
        %491 = vmatprep.subr.mxu0 0.0
        %492 = vmatpush2.xpose.msra.mxu0 0.0
        %493 = vmatprep.subr.mxu0 0.0
        %494 = vmatpush2.xpose.msra.mxu0 0.0
        %495 = vmatprep.subr.mxu0 0.0
        %496 = vmatpush2.xpose.msra.mxu0 0.0
        %497 = vmatprep.subr.mxu0 0.0
        %498 = vmatpush2.xpose.msra.mxu0 0.0
        %499 = vmatprep.subr.mxu0 0.0
        %500 = vmatpush2.xpose.msra.mxu0 0.0
        %501 = vmatprep.subr.mxu0 0.0
        %502 = vmatpush2.xpose.msra.mxu0 0.0
        %503 = vmatprep.subr.mxu0 0.0
        %504 = vmatpush2.xpose.msra.mxu0 0.0
        %505 = vmatprep.subr.mxu0 0.0
        %506 = vmatpush2.xpose.msra.mxu0 0.0
        %507 = vmatprep.subr.mxu0 0.0
        %508 = vmatpush2.xpose.msra.mxu0 0.0
        %509 = vmatprep.subr.mxu0 0.0
        %510 = vmatpush2.xpose.msra.mxu0 0.0
        %511 = vmatprep.subr.mxu0 0.0
        %512 = vmatpush2.xpose.msra.mxu0 0.0
        %513 = vmatprep.mubr.f32.mxu0 0.0
        %514 = vmatmul.mubr.f32.gmra.mxu0 %v445
        %v515 = vpop.f32.mrf.mxu0
        %v516 = vadd.f32 %v289, %v515
        %v517 = vpop.f32.mrf.mxu0
        %518 = vdwg.mxu0
        %519 = vrot.lane.b32.xlu0 %v287, 120
        %v520 = vpop.permute.xlu0 %519
        %v521 = vsel %vm292, %v287, 0
        %v523 = vsel %vm292, %v520, 0
        %525 = vmatprep.subr.mxu0 0.0
        %526 = vmatpush1.xpose.msra.mxu0 0.0
        %527 = vmatprep.subr.mxu0 0.0
        %528 = vmatpush1.xpose.msra.mxu0 0.0
        %529 = vmatprep.subr.mxu0 0.0
        %530 = vmatpush1.xpose.msra.mxu0 0.0
        %531 = vmatprep.subr.mxu0 0.0
        %532 = vmatpush1.xpose.msra.mxu0 0.0
        %533 = vmatprep.subr.mxu0 0.0
        %534 = vmatpush1.xpose.msra.mxu0 0.0
        %535 = vmatprep.subr.mxu0 0.0
        %536 = vmatpush1.xpose.msra.mxu0 0.0
        %537 = vmatprep.subr.mxu0 0.0
        %538 = vmatpush1.xpose.msra.mxu0 0.0
        %539 = vmatprep.subr.mxu0 0.0
        %540 = vmatpush1.xpose.msra.mxu0 0.0
        %541 = vmatprep.subr.mxu0 0.0
        %542 = vmatpush1.xpose.msra.mxu0 0.0
        %543 = vmatprep.subr.mxu0 0.0
        %544 = vmatpush1.xpose.msra.mxu0 0.0
        %545 = vmatprep.subr.mxu0 0.0
        %546 = vmatpush1.xpose.msra.mxu0 0.0
        %547 = vmatprep.subr.mxu0 0.0
        %548 = vmatpush1.xpose.msra.mxu0 0.0
        %549 = vmatprep.subr.mxu0 0.0
        %550 = vmatpush1.xpose.msra.mxu0 0.0
        %551 = vmatprep.subr.mxu0 0.0
        %552 = vmatpush1.xpose.msra.mxu0 0.0
        %553 = vmatprep.subr.mxu0 0.0
        %554 = vmatpush1.xpose.msra.mxu0 0.0
        %555 = vmatprep.subr.mxu0 0.0
        %556 = vmatpush1.xpose.msra.mxu0 %v523
        %557 = vmatprep.subr.mxu0 0.0
        %558 = vmatpush2.xpose.msra.mxu0 0.0
        %559 = vmatprep.subr.mxu0 0.0
        %560 = vmatpush2.xpose.msra.mxu0 0.0
        %561 = vmatprep.subr.mxu0 0.0
        %562 = vmatpush2.xpose.msra.mxu0 0.0
        %563 = vmatprep.subr.mxu0 0.0
        %564 = vmatpush2.xpose.msra.mxu0 0.0
        %565 = vmatprep.subr.mxu0 0.0
        %566 = vmatpush2.xpose.msra.mxu0 0.0
        %567 = vmatprep.subr.mxu0 0.0
        %568 = vmatpush2.xpose.msra.mxu0 0.0
        %569 = vmatprep.subr.mxu0 0.0
        %570 = vmatpush2.xpose.msra.mxu0 0.0
        %571 = vmatprep.subr.mxu0 0.0
        %572 = vmatpush2.xpose.msra.mxu0 0.0
        %573 = vmatprep.subr.mxu0 0.0
        %574 = vmatpush2.xpose.msra.mxu0 0.0
        %575 = vmatprep.subr.mxu0 0.0
        %576 = vmatpush2.xpose.msra.mxu0 0.0
        %577 = vmatprep.subr.mxu0 0.0
        %578 = vmatpush2.xpose.msra.mxu0 0.0
        %579 = vmatprep.subr.mxu0 0.0
        %580 = vmatpush2.xpose.msra.mxu0 0.0
        %581 = vmatprep.subr.mxu0 0.0
        %582 = vmatpush2.xpose.msra.mxu0 0.0
        %583 = vmatprep.subr.mxu0 0.0
        %584 = vmatpush2.xpose.msra.mxu0 0.0
        %585 = vmatprep.subr.mxu0 0.0
        %586 = vmatpush2.xpose.msra.mxu0 0.0
        %587 = vmatprep.subr.mxu0 0.0
        %588 = vmatpush2.xpose.msra.mxu0 0.0
        %589 = vmatprep.mubr.f32.mxu0 0.0
        %590 = vmatmul.mubr.f32.gmra.mxu0 %v521
        %v591 = vpop.f32.mrf.mxu0
        %v592 = vadd.f32 %v289, %v591
        %v593 = vpop.f32.mrf.mxu0
        %594 = vdwg.mxu0
        %v595 = vsel %vm292, %v364, -inf
        %596 = vmax.xlane.f32.xlu0 %v595
        %v597 = vpop.xlane.xlu0 %596
        %v598 = vsel %vm292, %v440, -inf
        %599 = vmax.xlane.f32.xlu0 %v598
        %v600 = vpop.xlane.xlu0 %599
        %v601 = vsel %vm292, %v516, -inf
        %602 = vmax.xlane.f32.xlu0 %v601
        %v603 = vpop.xlane.xlu0 %602
        %v604 = vsel %vm292, %v592, -inf
        %605 = vmax.xlane.f32.xlu0 %v604
        %v606 = vpop.xlane.xlu0 %605
        %v607 = vsub.f32 %v364, %v597
        %v608 = vsub.f32 %v440, %v600
        %v609 = vsub.f32 %v516, %v603
        %v610 = vsub.f32 %v592, %v606
        %v611 = vmul.f32 %v607, 1.442695
        %v612 = vpow.pop %v611
        %v613 = vmul.f32 %v608, 1.442695
        %v614 = vpow.pop %v613
        %v615 = vmul.f32 %v609, 1.442695
        %v616 = vpow.pop %v615
        %v617 = vmul.f32 %v610, 1.442695
        %v618 = vpow.pop %v617
        %v619 = vsel %vm292, %v612, 0.0
        %620 = vadd.xlane.f32.xlu0 %v619
        %v621 = vpop.xlane.xlu0 %620
        %v622 = vsel %vm292, %v614, 0.0
        %623 = vadd.xlane.f32.xlu0 %v622
        %v624 = vpop.xlane.xlu0 %623
        %v625 = vsel %vm292, %v616, 0.0
        %626 = vadd.xlane.f32.xlu0 %v625
        %v627 = vpop.xlane.xlu0 %626
        %v628 = vsel %vm292, %v618, 0.0
        %629 = vadd.xlane.f32.xlu0 %v628
        %v630 = vpop.xlane.xlu0 %629
        %v631 = vrcp.pop %v621
        %v632 = vmul.f32 1.0, %v631
        %v633 = vrcp.pop %v624
        %v634 = vmul.f32 1.0, %v633
        %v635 = vrcp.pop %v627
        %v636 = vmul.f32 1.0, %v635
        %v637 = vrcp.pop %v630
        %v638 = vmul.f32 1.0, %v637
        %v639 = vmul.f32 %v612, %v632
        %v640 = vmul.f32 %v614, %v634
        %v641 = vmul.f32 %v616, %v636
        %v642 = vmul.f32 %v618, %v638
        %643 = vrot.lane.b32.xlu0 %v278, 112
        %v644 = vpop.permute.xlu0 %643
        %v647 = vsel %vm292, %v639, 0
        %649 = vmatprep.subr.mxu0 0.0
        %650 = vmatpush1.msra.mxu0 0.0
        %651 = vmatprep.subr.mxu0 0.0
        %652 = vmatpush1.msra.mxu0 0.0
        %653 = vmatprep.subr.mxu0 0.0
        %654 = vmatpush1.msra.mxu0 0.0
        %655 = vmatprep.subr.mxu0 0.0
        %656 = vmatpush1.msra.mxu0 0.0
        %657 = vmatprep.subr.mxu0 0.0
        %658 = vmatpush1.msra.mxu0 0.0
        %659 = vmatprep.subr.mxu0 0.0
        %660 = vmatpush1.msra.mxu0 0.0
        %661 = vmatprep.subr.mxu0 0.0
        %662 = vmatpush1.msra.mxu0 0.0
        %663 = vmatprep.subr.mxu0 0.0
        %664 = vmatpush1.msra.mxu0 0.0
        %665 = vmatprep.subr.mxu0 0.0
        %666 = vmatpush1.msra.mxu0 0.0
        %667 = vmatprep.subr.mxu0 0.0
        %668 = vmatpush1.msra.mxu0 0.0
        %669 = vmatprep.subr.mxu0 0.0
        %670 = vmatpush1.msra.mxu0 0.0
        %671 = vmatprep.subr.mxu0 0.0
        %672 = vmatpush1.msra.mxu0 0.0
        %673 = vmatprep.subr.mxu0 0.0
        %674 = vmatpush1.msra.mxu0 0.0
        %675 = vmatprep.subr.mxu0 0.0
        %676 = vmatpush1.msra.mxu0 0.0
        %677 = vmatprep.subr.mxu0 0.0
        %678 = vmatpush1.msra.mxu0 0.0
        %679 = vmatprep.subr.mxu0 0.0
        %680 = vmatpush1.msra.mxu0 %v644
        %681 = vmatprep.subr.mxu0 0.0
        %682 = vmatpush2.msra.mxu0 0.0
        %683 = vmatprep.subr.mxu0 0.0
        %684 = vmatpush2.msra.mxu0 0.0
        %685 = vmatprep.subr.mxu0 0.0
        %686 = vmatpush2.msra.mxu0 0.0
        %687 = vmatprep.subr.mxu0 0.0
        %688 = vmatpush2.msra.mxu0 0.0
        %689 = vmatprep.subr.mxu0 0.0
        %690 = vmatpush2.msra.mxu0 0.0
        %691 = vmatprep.subr.mxu0 0.0
        %692 = vmatpush2.msra.mxu0 0.0
        %693 = vmatprep.subr.mxu0 0.0
        %694 = vmatpush2.msra.mxu0 0.0
        %695 = vmatprep.subr.mxu0 0.0
        %696 = vmatpush2.msra.mxu0 0.0
        %697 = vmatprep.subr.mxu0 0.0
        %698 = vmatpush2.msra.mxu0 0.0
        %699 = vmatprep.subr.mxu0 0.0
        %700 = vmatpush2.msra.mxu0 0.0
        %701 = vmatprep.subr.mxu0 0.0
        %702 = vmatpush2.msra.mxu0 0.0
        %703 = vmatprep.subr.mxu0 0.0
        %704 = vmatpush2.msra.mxu0 0.0
        %705 = vmatprep.subr.mxu0 0.0
        %706 = vmatpush2.msra.mxu0 0.0
        %707 = vmatprep.subr.mxu0 0.0
        %708 = vmatpush2.msra.mxu0 0.0
        %709 = vmatprep.subr.mxu0 0.0
        %710 = vmatpush2.msra.mxu0 0.0
        %711 = vmatprep.subr.mxu0 0.0
        %712 = vmatpush2.msra.mxu0 0.0
        %713 = vmatprep.mubr.f32.mxu0 0.0
        %714 = vmatmul.mubr.f32.gmra.mxu0 %v647
        %v715 = vpop.f32.mrf.mxu0
        %v716 = vadd.f32 0.0, %v715
        %v717 = vpop.f32.mrf.mxu0
        %718 = vdwg.mxu0
        %719 = vrot.lane.b32.xlu0 %v283, 112
        %v720 = vpop.permute.xlu0 %719
        %v723 = vsel %vm292, %v640, 0
        %725 = vmatprep.subr.mxu0 0.0
        %726 = vmatpush1.msra.mxu0 0.0
        %727 = vmatprep.subr.mxu0 0.0
        %728 = vmatpush1.msra.mxu0 0.0
        %729 = vmatprep.subr.mxu0 0.0
        %730 = vmatpush1.msra.mxu0 0.0
        %731 = vmatprep.subr.mxu0 0.0
        %732 = vmatpush1.msra.mxu0 0.0
        %733 = vmatprep.subr.mxu0 0.0
        %734 = vmatpush1.msra.mxu0 0.0
        %735 = vmatprep.subr.mxu0 0.0
        %736 = vmatpush1.msra.mxu0 0.0
        %737 = vmatprep.subr.mxu0 0.0
        %738 = vmatpush1.msra.mxu0 0.0
        %739 = vmatprep.subr.mxu0 0.0
        %740 = vmatpush1.msra.mxu0 0.0
        %741 = vmatprep.subr.mxu0 0.0
        %742 = vmatpush1.msra.mxu0 0.0
        %743 = vmatprep.subr.mxu0 0.0
        %744 = vmatpush1.msra.mxu0 0.0
        %745 = vmatprep.subr.mxu0 0.0
        %746 = vmatpush1.msra.mxu0 0.0
        %747 = vmatprep.subr.mxu0 0.0
        %748 = vmatpush1.msra.mxu0 0.0
        %749 = vmatprep.subr.mxu0 0.0
        %750 = vmatpush1.msra.mxu0 0.0
        %751 = vmatprep.subr.mxu0 0.0
        %752 = vmatpush1.msra.mxu0 0.0
        %753 = vmatprep.subr.mxu0 0.0
        %754 = vmatpush1.msra.mxu0 0.0
        %755 = vmatprep.subr.mxu0 0.0
        %756 = vmatpush1.msra.mxu0 %v720
        %757 = vmatprep.subr.mxu0 0.0
        %758 = vmatpush2.msra.mxu0 0.0
        %759 = vmatprep.subr.mxu0 0.0
        %760 = vmatpush2.msra.mxu0 0.0
        %761 = vmatprep.subr.mxu0 0.0
        %762 = vmatpush2.msra.mxu0 0.0
        %763 = vmatprep.subr.mxu0 0.0
        %764 = vmatpush2.msra.mxu0 0.0
        %765 = vmatprep.subr.mxu0 0.0
        %766 = vmatpush2.msra.mxu0 0.0
        %767 = vmatprep.subr.mxu0 0.0
        %768 = vmatpush2.msra.mxu0 0.0
        %769 = vmatprep.subr.mxu0 0.0
        %770 = vmatpush2.msra.mxu0 0.0
        %771 = vmatprep.subr.mxu0 0.0
        %772 = vmatpush2.msra.mxu0 0.0
        %773 = vmatprep.subr.mxu0 0.0
        %774 = vmatpush2.msra.mxu0 0.0
        %775 = vmatprep.subr.mxu0 0.0
        %776 = vmatpush2.msra.mxu0 0.0
        %777 = vmatprep.subr.mxu0 0.0
        %778 = vmatpush2.msra.mxu0 0.0
        %779 = vmatprep.subr.mxu0 0.0
        %780 = vmatpush2.msra.mxu0 0.0
        %781 = vmatprep.subr.mxu0 0.0
        %782 = vmatpush2.msra.mxu0 0.0
        %783 = vmatprep.subr.mxu0 0.0
        %784 = vmatpush2.msra.mxu0 0.0
        %785 = vmatprep.subr.mxu0 0.0
        %786 = vmatpush2.msra.mxu0 0.0
        %787 = vmatprep.subr.mxu0 0.0
        %788 = vmatpush2.msra.mxu0 0.0
        %789 = vmatprep.mubr.f32.mxu0 0.0
        %790 = vmatmul.mubr.f32.gmra.mxu0 %v723
        %v791 = vpop.f32.mrf.mxu0
        %v792 = vadd.f32 0.0, %v791
        %v793 = vpop.f32.mrf.mxu0
        %794 = vdwg.mxu0
        %795 = vrot.lane.b32.xlu0 %v285, 112
        %v796 = vpop.permute.xlu0 %795
        %v799 = vsel %vm292, %v641, 0
        %801 = vmatprep.subr.mxu0 0.0
        %802 = vmatpush1.msra.mxu0 0.0
        %803 = vmatprep.subr.mxu0 0.0
        %804 = vmatpush1.msra.mxu0 0.0
        %805 = vmatprep.subr.mxu0 0.0
        %806 = vmatpush1.msra.mxu0 0.0
        %807 = vmatprep.subr.mxu0 0.0
        %808 = vmatpush1.msra.mxu0 0.0
        %809 = vmatprep.subr.mxu0 0.0
        %810 = vmatpush1.msra.mxu0 0.0
        %811 = vmatprep.subr.mxu0 0.0
        %812 = vmatpush1.msra.mxu0 0.0
        %813 = vmatprep.subr.mxu0 0.0
        %814 = vmatpush1.msra.mxu0 0.0
        %815 = vmatprep.subr.mxu0 0.0
        %816 = vmatpush1.msra.mxu0 0.0
        %817 = vmatprep.subr.mxu0 0.0
        %818 = vmatpush1.msra.mxu0 0.0
        %819 = vmatprep.subr.mxu0 0.0
        %820 = vmatpush1.msra.mxu0 0.0
        %821 = vmatprep.subr.mxu0 0.0
        %822 = vmatpush1.msra.mxu0 0.0
        %823 = vmatprep.subr.mxu0 0.0
        %824 = vmatpush1.msra.mxu0 0.0
        %825 = vmatprep.subr.mxu0 0.0
        %826 = vmatpush1.msra.mxu0 0.0
        %827 = vmatprep.subr.mxu0 0.0
        %828 = vmatpush1.msra.mxu0 0.0
        %829 = vmatprep.subr.mxu0 0.0
        %830 = vmatpush1.msra.mxu0 0.0
        %831 = vmatprep.subr.mxu0 0.0
        %832 = vmatpush1.msra.mxu0 %v796
        %833 = vmatprep.subr.mxu0 0.0
        %834 = vmatpush2.msra.mxu0 0.0
        %835 = vmatprep.subr.mxu0 0.0
        %836 = vmatpush2.msra.mxu0 0.0
        %837 = vmatprep.subr.mxu0 0.0
        %838 = vmatpush2.msra.mxu0 0.0
        %839 = vmatprep.subr.mxu0 0.0
        %840 = vmatpush2.msra.mxu0 0.0
        %841 = vmatprep.subr.mxu0 0.0
        %842 = vmatpush2.msra.mxu0 0.0
        %843 = vmatprep.subr.mxu0 0.0
        %844 = vmatpush2.msra.mxu0 0.0
        %845 = vmatprep.subr.mxu0 0.0
        %846 = vmatpush2.msra.mxu0 0.0
        %847 = vmatprep.subr.mxu0 0.0
        %848 = vmatpush2.msra.mxu0 0.0
        %849 = vmatprep.subr.mxu0 0.0
        %850 = vmatpush2.msra.mxu0 0.0
        %851 = vmatprep.subr.mxu0 0.0
        %852 = vmatpush2.msra.mxu0 0.0
        %853 = vmatprep.subr.mxu0 0.0
        %854 = vmatpush2.msra.mxu0 0.0
        %855 = vmatprep.subr.mxu0 0.0
        %856 = vmatpush2.msra.mxu0 0.0
        %857 = vmatprep.subr.mxu0 0.0
        %858 = vmatpush2.msra.mxu0 0.0
        %859 = vmatprep.subr.mxu0 0.0
        %860 = vmatpush2.msra.mxu0 0.0
        %861 = vmatprep.subr.mxu0 0.0
        %862 = vmatpush2.msra.mxu0 0.0
        %863 = vmatprep.subr.mxu0 0.0
        %864 = vmatpush2.msra.mxu0 0.0
        %865 = vmatprep.mubr.f32.mxu0 0.0
        %866 = vmatmul.mubr.f32.gmra.mxu0 %v799
        %v867 = vpop.f32.mrf.mxu0
        %v868 = vadd.f32 0.0, %v867
        %v869 = vpop.f32.mrf.mxu0
        %870 = vdwg.mxu0
        %871 = vrot.lane.b32.xlu0 %v287, 112
        %v872 = vpop.permute.xlu0 %871
        %v875 = vsel %vm292, %v642, 0
        %877 = vmatprep.subr.mxu0 0.0
        %878 = vmatpush1.msra.mxu0 0.0
        %879 = vmatprep.subr.mxu0 0.0
        %880 = vmatpush1.msra.mxu0 0.0
        %881 = vmatprep.subr.mxu0 0.0
        %882 = vmatpush1.msra.mxu0 0.0
        %883 = vmatprep.subr.mxu0 0.0
        %884 = vmatpush1.msra.mxu0 0.0
        %885 = vmatprep.subr.mxu0 0.0
        %886 = vmatpush1.msra.mxu0 0.0
        %887 = vmatprep.subr.mxu0 0.0
        %888 = vmatpush1.msra.mxu0 0.0
        %889 = vmatprep.subr.mxu0 0.0
        %890 = vmatpush1.msra.mxu0 0.0
        %891 = vmatprep.subr.mxu0 0.0
        %892 = vmatpush1.msra.mxu0 0.0
        %893 = vmatprep.subr.mxu0 0.0
        %894 = vmatpush1.msra.mxu0 0.0
        %895 = vmatprep.subr.mxu0 0.0
        %896 = vmatpush1.msra.mxu0 0.0
        %897 = vmatprep.subr.mxu0 0.0
        %898 = vmatpush1.msra.mxu0 0.0
        %899 = vmatprep.subr.mxu0 0.0
        %900 = vmatpush1.msra.mxu0 0.0
        %901 = vmatprep.subr.mxu0 0.0
        %902 = vmatpush1.msra.mxu0 0.0
        %903 = vmatprep.subr.mxu0 0.0
        %904 = vmatpush1.msra.mxu0 0.0
        %905 = vmatprep.subr.mxu0 0.0
        %906 = vmatpush1.msra.mxu0 0.0
        %907 = vmatprep.subr.mxu0 0.0
        %908 = vmatpush1.msra.mxu0 %v872
        %909 = vmatprep.subr.mxu0 0.0
        %910 = vmatpush2.msra.mxu0 0.0
        %911 = vmatprep.subr.mxu0 0.0
        %912 = vmatpush2.msra.mxu0 0.0
        %913 = vmatprep.subr.mxu0 0.0
        %914 = vmatpush2.msra.mxu0 0.0
        %915 = vmatprep.subr.mxu0 0.0
        %916 = vmatpush2.msra.mxu0 0.0
        %917 = vmatprep.subr.mxu0 0.0
        %918 = vmatpush2.msra.mxu0 0.0
        %919 = vmatprep.subr.mxu0 0.0
        %920 = vmatpush2.msra.mxu0 0.0
        %921 = vmatprep.subr.mxu0 0.0
        %922 = vmatpush2.msra.mxu0 0.0
        %923 = vmatprep.subr.mxu0 0.0
        %924 = vmatpush2.msra.mxu0 0.0
        %925 = vmatprep.subr.mxu0 0.0
        %926 = vmatpush2.msra.mxu0 0.0
        %927 = vmatprep.subr.mxu0 0.0
        %928 = vmatpush2.msra.mxu0 0.0
        %929 = vmatprep.subr.mxu0 0.0
        %930 = vmatpush2.msra.mxu0 0.0
        %931 = vmatprep.subr.mxu0 0.0
        %932 = vmatpush2.msra.mxu0 0.0
        %933 = vmatprep.subr.mxu0 0.0
        %934 = vmatpush2.msra.mxu0 0.0
        %935 = vmatprep.subr.mxu0 0.0
        %936 = vmatpush2.msra.mxu0 0.0
        %937 = vmatprep.subr.mxu0 0.0
        %938 = vmatpush2.msra.mxu0 0.0
        %939 = vmatprep.subr.mxu0 0.0
        %940 = vmatpush2.msra.mxu0 0.0
        %941 = vmatprep.mubr.f32.mxu0 0.0
        %942 = vmatmul.mubr.f32.gmra.mxu0 %v875
        %v943 = vpop.f32.mrf.mxu0
        %v944 = vadd.f32 0.0, %v943
        %v945 = vpop.f32.mrf.mxu0
        %946 = vdwg.mxu0
        %948 = vrot.lane.b32.xlu0 %v186, 96
        %v949 = vpop.permute.xlu0 %948
        %v952 = vsel %vm292, %v716, 0
        %954 = vmatprep.subr.mxu0 0.0
        %955 = vmatpush1.msra.mxu0 0.0
        %956 = vmatprep.subr.mxu0 0.0
        %957 = vmatpush1.msra.mxu0 0.0
        %958 = vmatprep.subr.mxu0 0.0
        %959 = vmatpush1.msra.mxu0 0.0
        %960 = vmatprep.subr.mxu0 0.0
        %961 = vmatpush1.msra.mxu0 0.0
        %962 = vmatprep.subr.mxu0 0.0
        %963 = vmatpush1.msra.mxu0 0.0
        %964 = vmatprep.subr.mxu0 0.0
        %965 = vmatpush1.msra.mxu0 0.0
        %966 = vmatprep.subr.mxu0 0.0
        %967 = vmatpush1.msra.mxu0 0.0
        %968 = vmatprep.subr.mxu0 0.0
        %969 = vmatpush1.msra.mxu0 0.0
        %970 = vmatprep.subr.mxu0 0.0
        %971 = vmatpush1.msra.mxu0 0.0
        %972 = vmatprep.subr.mxu0 0.0
        %973 = vmatpush1.msra.mxu0 0.0
        %974 = vmatprep.subr.mxu0 0.0
        %975 = vmatpush1.msra.mxu0 0.0
        %976 = vmatprep.subr.mxu0 0.0
        %977 = vmatpush1.msra.mxu0 0.0
        %978 = vmatprep.subr.mxu0 0.0
        %979 = vmatpush1.msra.mxu0 0.0
        %980 = vmatprep.subr.mxu0 0.0
        %981 = vmatpush1.msra.mxu0 0.0
        %982 = vmatprep.subr.mxu0 0.0
        %983 = vmatpush1.msra.mxu0 0.0
        %984 = vmatprep.subr.mxu0 0.0
        %985 = vmatpush1.msra.mxu0 %v949
        %986 = vmatprep.subr.mxu0 0.0
        %987 = vmatpush2.msra.mxu0 0.0
        %988 = vmatprep.subr.mxu0 0.0
        %989 = vmatpush2.msra.mxu0 0.0
        %990 = vmatprep.subr.mxu0 0.0
        %991 = vmatpush2.msra.mxu0 0.0
        %992 = vmatprep.subr.mxu0 0.0
        %993 = vmatpush2.msra.mxu0 0.0
        %994 = vmatprep.subr.mxu0 0.0
        %995 = vmatpush2.msra.mxu0 0.0
        %996 = vmatprep.subr.mxu0 0.0
        %997 = vmatpush2.msra.mxu0 0.0
        %998 = vmatprep.subr.mxu0 0.0
        %999 = vmatpush2.msra.mxu0 0.0
        %1000 = vmatprep.subr.mxu0 0.0
        %1001 = vmatpush2.msra.mxu0 0.0
        %1002 = vmatprep.subr.mxu0 0.0
        %1003 = vmatpush2.msra.mxu0 0.0
        %1004 = vmatprep.subr.mxu0 0.0
        %1005 = vmatpush2.msra.mxu0 0.0
        %1006 = vmatprep.subr.mxu0 0.0
        %1007 = vmatpush2.msra.mxu0 0.0
        %1008 = vmatprep.subr.mxu0 0.0
        %1009 = vmatpush2.msra.mxu0 0.0
        %1010 = vmatprep.subr.mxu0 0.0
        %1011 = vmatpush2.msra.mxu0 0.0
        %1012 = vmatprep.subr.mxu0 0.0
        %1013 = vmatpush2.msra.mxu0 0.0
        %1014 = vmatprep.subr.mxu0 0.0
        %1015 = vmatpush2.msra.mxu0 0.0
        %1016 = vmatprep.subr.mxu0 0.0
        %1017 = vmatpush2.msra.mxu0 0.0
        %1018 = vmatprep.mubr.f32.mxu0 0.0
        %1019 = vmatmul.mubr.f32.gmra.mxu0 %v952
        %v1020 = vpop.f32.mrf.mxu0
        %v1021 = vadd.f32 0.0, %v1020
        %v1022 = vpop.f32.mrf.mxu0
        %1023 = vdwg.mxu0
        %1025 = vrot.lane.b32.xlu0 %v188, 96
        %v1026 = vpop.permute.xlu0 %1025
        %v1029 = vsel %vm292, %v792, 0
        %1031 = vmatprep.subr.mxu0 0.0
        %1032 = vmatpush1.msra.mxu0 0.0
        %1033 = vmatprep.subr.mxu0 0.0
        %1034 = vmatpush1.msra.mxu0 0.0
        %1035 = vmatprep.subr.mxu0 0.0
        %1036 = vmatpush1.msra.mxu0 0.0
        %1037 = vmatprep.subr.mxu0 0.0
        %1038 = vmatpush1.msra.mxu0 0.0
        %1039 = vmatprep.subr.mxu0 0.0
        %1040 = vmatpush1.msra.mxu0 0.0
        %1041 = vmatprep.subr.mxu0 0.0
        %1042 = vmatpush1.msra.mxu0 0.0
        %1043 = vmatprep.subr.mxu0 0.0
        %1044 = vmatpush1.msra.mxu0 0.0
        %1045 = vmatprep.subr.mxu0 0.0
        %1046 = vmatpush1.msra.mxu0 0.0
        %1047 = vmatprep.subr.mxu0 0.0
        %1048 = vmatpush1.msra.mxu0 0.0
        %1049 = vmatprep.subr.mxu0 0.0
        %1050 = vmatpush1.msra.mxu0 0.0
        %1051 = vmatprep.subr.mxu0 0.0
        %1052 = vmatpush1.msra.mxu0 0.0
        %1053 = vmatprep.subr.mxu0 0.0
        %1054 = vmatpush1.msra.mxu0 0.0
        %1055 = vmatprep.subr.mxu0 0.0
        %1056 = vmatpush1.msra.mxu0 0.0
        %1057 = vmatprep.subr.mxu0 0.0
        %1058 = vmatpush1.msra.mxu0 0.0
        %1059 = vmatprep.subr.mxu0 0.0
        %1060 = vmatpush1.msra.mxu0 0.0
        %1061 = vmatprep.subr.mxu0 0.0
        %1062 = vmatpush1.msra.mxu0 %v1026
        %1063 = vmatprep.subr.mxu0 0.0
        %1064 = vmatpush2.msra.mxu0 0.0
        %1065 = vmatprep.subr.mxu0 0.0
        %1066 = vmatpush2.msra.mxu0 0.0
        %1067 = vmatprep.subr.mxu0 0.0
        %1068 = vmatpush2.msra.mxu0 0.0
        %1069 = vmatprep.subr.mxu0 0.0
        %1070 = vmatpush2.msra.mxu0 0.0
        %1071 = vmatprep.subr.mxu0 0.0
        %1072 = vmatpush2.msra.mxu0 0.0
        %1073 = vmatprep.subr.mxu0 0.0
        %1074 = vmatpush2.msra.mxu0 0.0
        %1075 = vmatprep.subr.mxu0 0.0
        %1076 = vmatpush2.msra.mxu0 0.0
        %1077 = vmatprep.subr.mxu0 0.0
        %1078 = vmatpush2.msra.mxu0 0.0
        %1079 = vmatprep.subr.mxu0 0.0
        %1080 = vmatpush2.msra.mxu0 0.0
        %1081 = vmatprep.subr.mxu0 0.0
        %1082 = vmatpush2.msra.mxu0 0.0
        %1083 = vmatprep.subr.mxu0 0.0
        %1084 = vmatpush2.msra.mxu0 0.0
        %1085 = vmatprep.subr.mxu0 0.0
        %1086 = vmatpush2.msra.mxu0 0.0
        %1087 = vmatprep.subr.mxu0 0.0
        %1088 = vmatpush2.msra.mxu0 0.0
        %1089 = vmatprep.subr.mxu0 0.0
        %1090 = vmatpush2.msra.mxu0 0.0
        %1091 = vmatprep.subr.mxu0 0.0
        %1092 = vmatpush2.msra.mxu0 0.0
        %1093 = vmatprep.subr.mxu0 0.0
        %1094 = vmatpush2.msra.mxu0 0.0
        %1095 = vmatprep.mubr.f32.mxu0 0.0
        %1096 = vmatmul.mubr.f32.gmra.mxu0 %v1029
        %v1097 = vpop.f32.mrf.mxu0
        %v1098 = vadd.f32 0.0, %v1097
        %v1099 = vpop.f32.mrf.mxu0
        %1100 = vdwg.mxu0
        %1102 = vrot.lane.b32.xlu0 %v190, 96
        %v1103 = vpop.permute.xlu0 %1102
        %v1106 = vsel %vm292, %v868, 0
        %1108 = vmatprep.subr.mxu0 0.0
        %1109 = vmatpush1.msra.mxu0 0.0
        %1110 = vmatprep.subr.mxu0 0.0
        %1111 = vmatpush1.msra.mxu0 0.0
        %1112 = vmatprep.subr.mxu0 0.0
        %1113 = vmatpush1.msra.mxu0 0.0
        %1114 = vmatprep.subr.mxu0 0.0
        %1115 = vmatpush1.msra.mxu0 0.0
        %1116 = vmatprep.subr.mxu0 0.0
        %1117 = vmatpush1.msra.mxu0 0.0
        %1118 = vmatprep.subr.mxu0 0.0
        %1119 = vmatpush1.msra.mxu0 0.0
        %1120 = vmatprep.subr.mxu0 0.0
        %1121 = vmatpush1.msra.mxu0 0.0
        %1122 = vmatprep.subr.mxu0 0.0
        %1123 = vmatpush1.msra.mxu0 0.0
        %1124 = vmatprep.subr.mxu0 0.0
        %1125 = vmatpush1.msra.mxu0 0.0
        %1126 = vmatprep.subr.mxu0 0.0
        %1127 = vmatpush1.msra.mxu0 0.0
        %1128 = vmatprep.subr.mxu0 0.0
        %1129 = vmatpush1.msra.mxu0 0.0
        %1130 = vmatprep.subr.mxu0 0.0
        %1131 = vmatpush1.msra.mxu0 0.0
        %1132 = vmatprep.subr.mxu0 0.0
        %1133 = vmatpush1.msra.mxu0 0.0
        %1134 = vmatprep.subr.mxu0 0.0
        %1135 = vmatpush1.msra.mxu0 0.0
        %1136 = vmatprep.subr.mxu0 0.0
        %1137 = vmatpush1.msra.mxu0 0.0
        %1138 = vmatprep.subr.mxu0 0.0
        %1139 = vmatpush1.msra.mxu0 %v1103
        %1140 = vmatprep.subr.mxu0 0.0
        %1141 = vmatpush2.msra.mxu0 0.0
        %1142 = vmatprep.subr.mxu0 0.0
        %1143 = vmatpush2.msra.mxu0 0.0
        %1144 = vmatprep.subr.mxu0 0.0
        %1145 = vmatpush2.msra.mxu0 0.0
        %1146 = vmatprep.subr.mxu0 0.0
        %1147 = vmatpush2.msra.mxu0 0.0
        %1148 = vmatprep.subr.mxu0 0.0
        %1149 = vmatpush2.msra.mxu0 0.0
        %1150 = vmatprep.subr.mxu0 0.0
        %1151 = vmatpush2.msra.mxu0 0.0
        %1152 = vmatprep.subr.mxu0 0.0
        %1153 = vmatpush2.msra.mxu0 0.0
        %1154 = vmatprep.subr.mxu0 0.0
        %1155 = vmatpush2.msra.mxu0 0.0
        %1156 = vmatprep.subr.mxu0 0.0
        %1157 = vmatpush2.msra.mxu0 0.0
        %1158 = vmatprep.subr.mxu0 0.0
        %1159 = vmatpush2.msra.mxu0 0.0
        %1160 = vmatprep.subr.mxu0 0.0
        %1161 = vmatpush2.msra.mxu0 0.0
        %1162 = vmatprep.subr.mxu0 0.0
        %1163 = vmatpush2.msra.mxu0 0.0
        %1164 = vmatprep.subr.mxu0 0.0
        %1165 = vmatpush2.msra.mxu0 0.0
        %1166 = vmatprep.subr.mxu0 0.0
        %1167 = vmatpush2.msra.mxu0 0.0
        %1168 = vmatprep.subr.mxu0 0.0
        %1169 = vmatpush2.msra.mxu0 0.0
        %1170 = vmatprep.subr.mxu0 0.0
        %1171 = vmatpush2.msra.mxu0 0.0
        %1172 = vmatprep.mubr.f32.mxu0 0.0
        %1173 = vmatmul.mubr.f32.gmra.mxu0 %v1106
        %v1174 = vpop.f32.mrf.mxu0
        %v1175 = vadd.f32 0.0, %v1174
        %v1176 = vpop.f32.mrf.mxu0
        %1177 = vdwg.mxu0
        %1179 = vrot.lane.b32.xlu0 %v192, 96
        %v1180 = vpop.permute.xlu0 %1179
        %v1183 = vsel %vm292, %v944, 0
        %1185 = vmatprep.subr.mxu0 0.0
        %1186 = vmatpush1.msra.mxu0 0.0
        %1187 = vmatprep.subr.mxu0 0.0
        %1188 = vmatpush1.msra.mxu0 0.0
        %1189 = vmatprep.subr.mxu0 0.0
        %1190 = vmatpush1.msra.mxu0 0.0
        %1191 = vmatprep.subr.mxu0 0.0
        %1192 = vmatpush1.msra.mxu0 0.0
        %1193 = vmatprep.subr.mxu0 0.0
        %1194 = vmatpush1.msra.mxu0 0.0
        %1195 = vmatprep.subr.mxu0 0.0
        %1196 = vmatpush1.msra.mxu0 0.0
        %1197 = vmatprep.subr.mxu0 0.0
        %1198 = vmatpush1.msra.mxu0 0.0
        %1199 = vmatprep.subr.mxu0 0.0
        %1200 = vmatpush1.msra.mxu0 0.0
        %1201 = vmatprep.subr.mxu0 0.0
        %1202 = vmatpush1.msra.mxu0 0.0
        %1203 = vmatprep.subr.mxu0 0.0
        %1204 = vmatpush1.msra.mxu0 0.0
        %1205 = vmatprep.subr.mxu0 0.0
        %1206 = vmatpush1.msra.mxu0 0.0
        %1207 = vmatprep.subr.mxu0 0.0
        %1208 = vmatpush1.msra.mxu0 0.0
        %1209 = vmatprep.subr.mxu0 0.0
        %1210 = vmatpush1.msra.mxu0 0.0
        %1211 = vmatprep.subr.mxu0 0.0
        %1212 = vmatpush1.msra.mxu0 0.0
        %1213 = vmatprep.subr.mxu0 0.0
        %1214 = vmatpush1.msra.mxu0 0.0
        %1215 = vmatprep.subr.mxu0 0.0
        %1216 = vmatpush1.msra.mxu0 %v1180
        %1217 = vmatprep.subr.mxu0 0.0
        %1218 = vmatpush2.msra.mxu0 0.0
        %1219 = vmatprep.subr.mxu0 0.0
        %1220 = vmatpush2.msra.mxu0 0.0
        %1221 = vmatprep.subr.mxu0 0.0
        %1222 = vmatpush2.msra.mxu0 0.0
        %1223 = vmatprep.subr.mxu0 0.0
        %1224 = vmatpush2.msra.mxu0 0.0
        %1225 = vmatprep.subr.mxu0 0.0
        %1226 = vmatpush2.msra.mxu0 0.0
        %1227 = vmatprep.subr.mxu0 0.0
        %1228 = vmatpush2.msra.mxu0 0.0
        %1229 = vmatprep.subr.mxu0 0.0
        %1230 = vmatpush2.msra.mxu0 0.0
        %1231 = vmatprep.subr.mxu0 0.0
        %1232 = vmatpush2.msra.mxu0 0.0
        %1233 = vmatprep.subr.mxu0 0.0
        %1234 = vmatpush2.msra.mxu0 0.0
        %1235 = vmatprep.subr.mxu0 0.0
        %1236 = vmatpush2.msra.mxu0 0.0
        %1237 = vmatprep.subr.mxu0 0.0
        %1238 = vmatpush2.msra.mxu0 0.0
        %1239 = vmatprep.subr.mxu0 0.0
        %1240 = vmatpush2.msra.mxu0 0.0
        %1241 = vmatprep.subr.mxu0 0.0
        %1242 = vmatpush2.msra.mxu0 0.0
        %1243 = vmatprep.subr.mxu0 0.0
        %1244 = vmatpush2.msra.mxu0 0.0
        %1245 = vmatprep.subr.mxu0 0.0
        %1246 = vmatpush2.msra.mxu0 0.0
        %1247 = vmatprep.subr.mxu0 0.0
        %1248 = vmatpush2.msra.mxu0 0.0
        %1249 = vmatprep.mubr.f32.mxu0 0.0
        %1250 = vmatmul.mubr.f32.gmra.mxu0 %v1183
        %v1251 = vpop.f32.mrf.mxu0
        %v1252 = vadd.f32 0.0, %v1251
        %v1253 = vpop.f32.mrf.mxu0
        %1254 = vdwg.mxu0
        %v1255 = vsel %vm207, %v1021, 0.0
        %v1256 = vsel %vm207, %v1098, 0.0
        %v1257 = vadd.f32 %v1255, %v1256
        %v1258 = vsel %vm207, %v1175, 0.0
        %v1259 = vadd.f32 %v1257, %v1258
        %v1260 = vsel %vm207, %v1252, 0.0
        %v1261 = vadd.f32 %v1259, %v1260
        %v1262 = vlaneseq
        %v1263 = vshrl.u32 %v1262, 7
        %v1264 = vsub.s32 0, %v1263
        %v1265 = vrot.slane %v202, %v1264
        %1267 = vrot.lane.b32.xlu0 %v1265, 96
        %v1268 = vpop.permute.xlu0 %1267
        %v1270 = vadd.f32 %v1261, %v1268
        %v1271 = vadd.f32 %v1270, %v183
        %v1272 = vsel %vm207, %v1271, 0.0
        %1273 = vadd.xlane.f32.xlu0 %v1272
        %v1274 = vpop.xlane.xlu0 %1273
        %v1275 = vrcp.pop 32.0
        %v1276 = vmul.f32 %v1274, %v1275
        %v1277 = vsub.f32 %v1271, %v1276
        %v1278 = vmul.f32 %v1277, %v1277
        %v1279 = vsel %vm207, %v1278, 0.0
        %1280 = vadd.xlane.f32.xlu0 %v1279
        %v1281 = vpop.xlane.xlu0 %1280
        %v1282 = vmul.f32 %v1281, %v1275
        %v1283 = vadd.f32 %v1282, 1e-05
        %v1284 = vrsqrt.pop %v1283
        %v1285 = vmul.f32 %v1277, %v1284
        %v1286 = vlaneseq
        %v1287 = vshrl.u32 %v1286, 7
        %v1288 = vsub.s32 1, %v1287
        %v1289 = vrot.slane %v201, %v1288
        %1291 = vrot.lane.b32.xlu0 %v1289, 96
        %v1292 = vpop.permute.xlu0 %1291
        %v1294 = vmul.f32 %v1285, %v1292
        %1295 = vrot.lane.b32.xlu0 %v1289, 64
        %v1296 = vpop.permute.xlu0 %1295
        %v1298 = vadd.f32 %v1294, %v1296
        %1303 = vrot.lane.b32.xlu0 %v185, 32
        %v1304 = vpop.permute.xlu0 %1303
        %1305 = vrot.lane.b32.xlu0 %v186, 32
        %v1306 = vpop.permute.xlu0 %1305
        %1307 = vrot.lane.b32.xlu0 %v187, 32
        %v1308 = vpop.permute.xlu0 %1307
        %1309 = vrot.lane.b32.xlu0 %v188, 32
        %v1310 = vpop.permute.xlu0 %1309
        %1311 = vrot.lane.b32.xlu0 %v189, 32
        %v1312 = vpop.permute.xlu0 %1311
        %1313 = vrot.lane.b32.xlu0 %v190, 32
        %v1314 = vpop.permute.xlu0 %1313
        %1315 = vrot.lane.b32.xlu0 %v191, 32
        %v1316 = vpop.permute.xlu0 %1315
        %1317 = vrot.lane.b32.xlu0 %v192, 32
        %v1318 = vpop.permute.xlu0 %1317
        %v1319 = vsel %vm207, %v1304, %v1306
        %v1320 = vsel %vm207, %v1308, %v1310
        %v1321 = vsel %vm207, %v1312, %v1314
        %v1322 = vsel %vm207, %v1316, %v1318
        %1328 = vrot.lane.b32.xlu0 %v206, 32
        %v1329 = vpop.permute.xlu0 %1328
        %1330 = vrot.lane.b32.xlu0 %v1265, 32
        %v1331 = vpop.permute.xlu0 %1330
        %v1332 = vsel %vm207, %v1329, %v1331
        %v1335 = vsel %vm207, %v1298, 0
        %1337 = vmatprep.subr.mxu0 0.0
        %1338 = vmatpush1.msra.mxu0 0.0
        %1339 = vmatprep.subr.mxu0 0.0
        %1340 = vmatpush1.msra.mxu0 0.0
        %1341 = vmatprep.subr.mxu0 0.0
        %1342 = vmatpush1.msra.mxu0 0.0
        %1343 = vmatprep.subr.mxu0 0.0
        %1344 = vmatpush1.msra.mxu0 0.0
        %1345 = vmatprep.subr.mxu0 0.0
        %1346 = vmatpush1.msra.mxu0 0.0
        %1347 = vmatprep.subr.mxu0 0.0
        %1348 = vmatpush1.msra.mxu0 0.0
        %1349 = vmatprep.subr.mxu0 0.0
        %1350 = vmatpush1.msra.mxu0 0.0
        %1351 = vmatprep.subr.mxu0 0.0
        %1352 = vmatpush1.msra.mxu0 0.0
        %1353 = vmatprep.subr.mxu0 0.0
        %1354 = vmatpush1.msra.mxu0 0.0
        %1355 = vmatprep.subr.mxu0 0.0
        %1356 = vmatpush1.msra.mxu0 0.0
        %1357 = vmatprep.subr.mxu0 0.0
        %1358 = vmatpush1.msra.mxu0 0.0
        %1359 = vmatprep.subr.mxu0 0.0
        %1360 = vmatpush1.msra.mxu0 0.0
        %1361 = vmatprep.subr.mxu0 0.0
        %1362 = vmatpush1.msra.mxu0 %v1322
        %1363 = vmatprep.subr.mxu0 0.0
        %1364 = vmatpush1.msra.mxu0 %v1321
        %1365 = vmatprep.subr.mxu0 0.0
        %1366 = vmatpush1.msra.mxu0 %v1320
        %1367 = vmatprep.subr.mxu0 0.0
        %1368 = vmatpush1.msra.mxu0 %v1319
        %1369 = vmatprep.subr.mxu0 0.0
        %1370 = vmatpush2.msra.mxu0 0.0
        %1371 = vmatprep.subr.mxu0 0.0
        %1372 = vmatpush2.msra.mxu0 0.0
        %1373 = vmatprep.subr.mxu0 0.0
        %1374 = vmatpush2.msra.mxu0 0.0
        %1375 = vmatprep.subr.mxu0 0.0
        %1376 = vmatpush2.msra.mxu0 0.0
        %1377 = vmatprep.subr.mxu0 0.0
        %1378 = vmatpush2.msra.mxu0 0.0
        %1379 = vmatprep.subr.mxu0 0.0
        %1380 = vmatpush2.msra.mxu0 0.0
        %1381 = vmatprep.subr.mxu0 0.0
        %1382 = vmatpush2.msra.mxu0 0.0
        %1383 = vmatprep.subr.mxu0 0.0
        %1384 = vmatpush2.msra.mxu0 0.0
        %1385 = vmatprep.subr.mxu0 0.0
        %1386 = vmatpush2.msra.mxu0 0.0
        %1387 = vmatprep.subr.mxu0 0.0
        %1388 = vmatpush2.msra.mxu0 0.0
        %1389 = vmatprep.subr.mxu0 0.0
        %1390 = vmatpush2.msra.mxu0 0.0
        %1391 = vmatprep.subr.mxu0 0.0
        %1392 = vmatpush2.msra.mxu0 0.0
        %1393 = vmatprep.subr.mxu0 0.0
        %1394 = vmatpush2.msra.mxu0 0.0
        %1395 = vmatprep.subr.mxu0 0.0
        %1396 = vmatpush2.msra.mxu0 0.0
        %1397 = vmatprep.subr.mxu0 0.0
        %1398 = vmatpush2.msra.mxu0 0.0
        %1399 = vmatprep.subr.mxu0 0.0
        %1400 = vmatpush2.msra.mxu0 0.0
        %1401 = vmatprep.mubr.f32.mxu0 0.0
        %1402 = vmatmul.mubr.f32.gmra.mxu0 %v1335
        %v1403 = vpop.f32.mrf.mxu0
        %v1404 = vadd.f32 %v1332, %v1403
        %v1405 = vpop.f32.mrf.mxu0
        %1406 = vdwg.mxu0
        %v1407 = vmax.f32 %v1404, 0.0
        %vm1408 = vcmask 523264
        %v1410 = vsel %vm1408, %v1407, 0
        %1412 = vmatprep.subr.mxu0 0.0
        %1413 = vmatpush1.msra.mxu0 0.0
        %1414 = vmatprep.subr.mxu0 0.0
        %1415 = vmatpush1.msra.mxu0 0.0
        %1416 = vmatprep.subr.mxu0 0.0
        %1417 = vmatpush1.msra.mxu0 0.0
        %1418 = vmatprep.subr.mxu0 0.0
        %1419 = vmatpush1.msra.mxu0 0.0
        %1420 = vmatprep.subr.mxu0 0.0
        %1421 = vmatpush1.msra.mxu0 0.0
        %1422 = vmatprep.subr.mxu0 0.0
        %1423 = vmatpush1.msra.mxu0 0.0
        %1424 = vmatprep.subr.mxu0 0.0
        %1425 = vmatpush1.msra.mxu0 0.0
        %1426 = vmatprep.subr.mxu0 0.0
        %1427 = vmatpush1.msra.mxu0 0.0
        %1428 = vmatprep.subr.mxu0 0.0
        %1429 = vmatpush1.msra.mxu0 %v200
        %1430 = vmatprep.subr.mxu0 0.0
        %1431 = vmatpush1.msra.mxu0 %v199
        %1432 = vmatprep.subr.mxu0 0.0
        %1433 = vmatpush1.msra.mxu0 %v198
        %1434 = vmatprep.subr.mxu0 0.0
        %1435 = vmatpush1.msra.mxu0 %v197
        %1436 = vmatprep.subr.mxu0 0.0
        %1437 = vmatpush1.msra.mxu0 %v196
        %1438 = vmatprep.subr.mxu0 0.0
        %1439 = vmatpush1.msra.mxu0 %v195
        %1440 = vmatprep.subr.mxu0 0.0
        %1441 = vmatpush1.msra.mxu0 %v194
        %1442 = vmatprep.subr.mxu0 0.0
        %1443 = vmatpush1.msra.mxu0 %v193
        %1444 = vmatprep.subr.mxu0 0.0
        %1445 = vmatpush2.msra.mxu0 0.0
        %1446 = vmatprep.subr.mxu0 0.0
        %1447 = vmatpush2.msra.mxu0 0.0
        %1448 = vmatprep.subr.mxu0 0.0
        %1449 = vmatpush2.msra.mxu0 0.0
        %1450 = vmatprep.subr.mxu0 0.0
        %1451 = vmatpush2.msra.mxu0 0.0
        %1452 = vmatprep.subr.mxu0 0.0
        %1453 = vmatpush2.msra.mxu0 0.0
        %1454 = vmatprep.subr.mxu0 0.0
        %1455 = vmatpush2.msra.mxu0 0.0
        %1456 = vmatprep.subr.mxu0 0.0
        %1457 = vmatpush2.msra.mxu0 0.0
        %1458 = vmatprep.subr.mxu0 0.0
        %1459 = vmatpush2.msra.mxu0 0.0
        %1460 = vmatprep.subr.mxu0 0.0
        %1461 = vmatpush2.msra.mxu0 0.0
        %1462 = vmatprep.subr.mxu0 0.0
        %1463 = vmatpush2.msra.mxu0 0.0
        %1464 = vmatprep.subr.mxu0 0.0
        %1465 = vmatpush2.msra.mxu0 0.0
        %1466 = vmatprep.subr.mxu0 0.0
        %1467 = vmatpush2.msra.mxu0 0.0
        %1468 = vmatprep.subr.mxu0 0.0
        %1469 = vmatpush2.msra.mxu0 0.0
        %1470 = vmatprep.subr.mxu0 0.0
        %1471 = vmatpush2.msra.mxu0 0.0
        %1472 = vmatprep.subr.mxu0 0.0
        %1473 = vmatpush2.msra.mxu0 0.0
        %1474 = vmatprep.subr.mxu0 0.0
        %1475 = vmatpush2.msra.mxu0 0.0
        %1476 = vmatprep.mubr.f32.mxu0 0.0
        %1477 = vmatmul.mubr.f32.gmra.mxu0 %v1410
        %v1478 = vpop.f32.mrf.mxu0
        %v1479 = vadd.f32 %v1289, %v1478
        %v1480 = vpop.f32.mrf.mxu0
        %1481 = vdwg.mxu0
        %v1482 = vadd.f32 %v1479, %v1298
        %v1483 = vsel %vm207, %v1482, 0.0
        %1484 = vadd.xlane.f32.xlu0 %v1483
        %v1485 = vpop.xlane.xlu0 %1484
        %v1486 = vmul.f32 %v1485, %v1275
        %v1487 = vsub.f32 %v1482, %v1486
        %v1488 = vmul.f32 %v1487, %v1487
        %v1489 = vsel %vm207, %v1488, 0.0
        %1490 = vadd.xlane.f32.xlu0 %v1489
        %v1491 = vpop.xlane.xlu0 %1490
        %v1492 = vmul.f32 %v1491, %v1275
        %v1493 = vadd.f32 %v1492, 1e-05
        %v1494 = vrsqrt.pop %v1493
        %v1495 = vmul.f32 %v1487, %v1494
        %1496 = vrot.lane.b32.xlu0 %v1289, 32
        %v1497 = vpop.permute.xlu0 %1496
        %v1499 = vmul.f32 %v1495, %v1497
        %v1500 = vlaneseq
        %v1501 = vshrl.u32 %v1500, 7
        %v1502 = vsub.s32 1, %v1501
        %v1503 = vrot.slane %v202, %v1502
        %v1504 = vadd.f32 %v1499, %v1503
        %1505 = vst.msk [vmem:[%s174] sm:$0xff] %vm207, %v1504
        %s1506 = sand.u32 %s98, 1
        %s1507 = scalar_lea.sflag [#allocation3], %s1506
        %s1508 = sand.u32 %s98, 1
        %s1509 = smul.addr %s1508, 8
        %s1510 = scalar_lea.vmem [#allocation2], %s1509
        // Predicated region
        $region33: #{tpu_custom_call.1} parent=31 // pred_check
          %p1511 = pneg %p108
        $region34: #{tpu_custom_call.1} parent=31 // pred_check_branch
          %1513 = sbr.rel (%p1511) target = $region36
        $region35: #{tpu_custom_call.1} parent=31 // pred_region
          %s1515 = ssub.s32 128, 128
          %1516 = vsyncadd %s1507, %s1515
          %s1517 = smul.addr %s17, 128
          %s1518 = scalar_lea.hbm %s3, %s1517
          %s1520 = sshll.u32 %s1510, 4
          %s1521 = int_to_ptr.vmem [resolvable:$true] %s1520
          %1523 = dma.vmem_to_hbm [thread:$0]  %s1521, 128, %s1518, %s1507
        $region36: #{tpu_custom_call.1} parent=31 // pred_fallthru
          _
      $region32: #{tpu_custom_call.1} parent=5 // pred_fallthru
        _
      %p1524 = scmp.le.s32.totalorder 2, %s12
      // Predicated region
      $region37: #{tpu_custom_call.1} parent=5 // pred_check
        %p1525 = pneg %p1524
      $region38: #{tpu_custom_call.1} parent=5 // pred_check_branch
        %1527 = sbr.rel (%p1525) target = $region40
      $region39: #{tpu_custom_call.1} parent=5 // pred_region
        %s1528 = ssub.s32 %s12, 2
        // Predicated region
        $region41: #{tpu_custom_call.1} parent=39 // pred_check
          %p1529 = pneg %p114
        $region42: #{tpu_custom_call.1} parent=39 // pred_check_branch
          %1531 = sbr.rel (%p1529) target = $region44
        $region43: #{tpu_custom_call.1} parent=39 // pred_region
          %s1532 = sand.u32 %s99, 1
          %s1533 = scalar_lea.sflag [#allocation3], %s1532
          %s1534 = sand.u32 %s99, 1
          %s1535 = smul.addr %s1534, 8
          %s1536 = scalar_lea.vmem [#allocation2], %s1535
          %1537 = dma.done %s1533, 128
        $region44: #{tpu_custom_call.1} parent=39 // pred_fallthru
          _
      $region40: #{tpu_custom_call.1} parent=5 // pred_fallthru
        _
    $region6: #{tpu_custom_call.1} parent=1 // loop_footer
      %s16 = sadd.s32 1, %s12
    $region7: #{tpu_custom_call.1} parent=1 // loop_footer_branch
      %11 = sbr.rel target = $region3
    $region8: #{tpu_custom_call.1} parent=1 // loop_exit
      _
    %1538 = vsyncpa [#allocation3], 1
    %s1539 = scalar_lea.sflag [#allocation3], 1
    %1540 = vsyncpa %s1539, 1

</llo_original>
